<compile_context>
chip_gen: v5e
topology: v5e:2x2
jax: 0.10.0
libtpu: 0.0.40
codegen_flags: <defaults>
</compile_context>

<pallas_src>
import functools

import jax
import jax.numpy as jnp
from jax.experimental import pallas as pl
from jax.experimental.pallas import tpu as pltpu


def _avg_pool_kernel(x_ref, o_ref, acc_ref, *, t_total, block_t):
    """x_ref: (tb, block_t, D) tile; o_ref: (tb, D); acc_ref: (tb, D) f32 scratch."""
    t = pl.program_id(1)

    @pl.when(t == 0)
    def _init():
        acc_ref[...] = jnp.zeros_like(acc_ref)

    x = x_ref[...].astype(jnp.float32)  # (tb, block_t, D)

    # Only compiled in when T is not a multiple of block_t: mask out-of-range time
    # rows of the boundary tile so padded (unspecified) data never enters the sum.
    if t_total % block_t != 0:
        valid = t_total - t * block_t  # > block_t for all non-last tiles
        time_idx = jax.lax.broadcasted_iota(jnp.int32, (1, block_t, 1), 1)
        x = jnp.where(time_idx < valid, x, 0.0)

    acc_ref[...] += jnp.sum(x, axis=1)

    @pl.when(t == pl.num_programs(1) - 1)
    def _finalize():
        # Single 1/T scale (compile-time constant), then cast back to the I/O dtype.
        o_ref[...] = (acc_ref[...] * jnp.float32(1.0 / t_total)).astype(o_ref.dtype)


def avg_pooling(x, *, block_b=None, block_t=None, min_pallas_elements=32 * 1024):
    """x: [B, T, D] -> mean over T (dim=-2) -> [B, D]."""
    B, T, D = x.shape

    # Fast path: at toy sizes the pallas_call fixed overhead dominates the ~KBs of data.
    if B * T * D < min_pallas_elements:
        return jnp.mean(x.astype(jnp.float32), axis=-2).astype(x.dtype)

    itemsize = jnp.dtype(x.dtype).itemsize

    # Batch tile: 8 rows per step (full sublane tile); B < 8 uses the full batch dim.
    tb = block_b if block_b is not None else min(8, B)

    # Time tile: budget ~2 MiB per in-flight input buffer (x2 for double buffering),
    # keep it a multiple of 8 unless it covers the whole T axis.
    if block_t is None:
        budget_bytes = 2 * 1024 * 1024
        block_t = max(8, (budget_bytes // max(1, tb * D * itemsize)) // 8 * 8)
    tT = min(block_t, T)
    if tT < T:
        tT = max(8, (tT // 8) * 8)

    grid = (pl.cdiv(B, tb), pl.cdiv(T, tT))  # reduction axis (T) last, "arbitrary"

    kernel = functools.partial(_avg_pool_kernel, t_total=T, block_t=tT)

    return pl.pallas_call(
        kernel,
        out_shape=jax.ShapeDtypeStruct((B, D), x.dtype),
        grid_spec=pltpu.PrefetchScalarGridSpec(
            num_scalar_prefetch=0,
            grid=grid,
            in_specs=[pl.BlockSpec((tb, tT, D), lambda b, t: (b, t, 0))],
            out_specs=pl.BlockSpec((tb, D), lambda b, t: (b, 0)),
            scratch_shapes=[pltpu.VMEM((tb, D), jnp.float32)],
        ),
        compiler_params=pltpu.CompilerParams(
            dimension_semantics=("parallel", "arbitrary"),
            vmem_limit_bytes=32 * 1024 * 1024,
        ),
    )(x)


if __name__ == "__main__":
    key0, key1 = jax.random.split(jax.random.PRNGKey(0))

    # Config 1: f32, D < 128, T not divisible by the time tile
    #   -> exercises the T-tiled accumulator path + boundary masking,
    #      and gives 2 "parallel" batch-block steps (v7x megacore).
    B, T, D = 16, 1000, 32
    x = jax.random.normal(key0, (B, T, D), dtype=jnp.float32)
    out = jax.block_until_ready(avg_pooling(x, block_t=256))
    ref = jnp.mean(x, axis=-2)
    assert out.shape == (B, D), out.shape
    assert jnp.allclose(out, ref, atol=1e-5, rtol=1e-5), "f32 mismatch vs reference"

    # Config 2: bf16 input, D a multiple of 128 -> lane-dense (unmasked) output
    #   stores, f32 in-kernel accumulation, half the HBM read bytes.
    B2, T2, D2 = 8, 512, 128
    x2 = jax.random.normal(key1, (B2, T2, D2), dtype=jnp.float32).astype(jnp.bfloat16)
    out2 = jax.block_until_ready(avg_pooling(x2))
    ref2 = jnp.mean(x2.astype(jnp.float32), axis=-2)
    assert out2.shape == (B2, D2), out2.shape
    assert jnp.allclose(out2.astype(jnp.float32), ref2, atol=2e-2, rtol=2e-2), (
        "bf16 mismatch vs reference"
    )

    # Config 3: toy shape from the module's typical unit test -> small-shape fast path.
    x3 = jax.random.normal(jax.random.PRNGKey(2), (2, 8, 32), dtype=jnp.float32)
    out3 = jax.block_until_ready(avg_pooling(x3))
    ref3 = jnp.mean(x3, axis=-2)
    assert jnp.allclose(out3, ref3, atol=1e-5, rtol=1e-5), "fast-path mismatch"

    print("KERNEL_OK")
</pallas_src>

<mosaic_0001>
module attributes {stable_mosaic.version = 11 : i64} {
  func.func @_avg_pool_kernel(%arg0: i32, %arg1: i32, %arg2: memref<8x256x32xf32, #tpu.memory_space<vmem>>, %arg3: memref<8x32xf32, #tpu.memory_space<vmem>>, %arg4: memref<8x32xf32, #tpu.memory_space<vmem>>) attributes {dimension_semantics = [#tpu.dimension_semantics<parallel>, #tpu.dimension_semantics<arbitrary>], iteration_bounds = array<i64: 2, 4>, scalar_prefetch = 0 : i64, scratch_operands = 1 : i64, tpu.core_type = #tpu.core_type<tc>, window_params = [{transform_indices = @transform_0, window_bounds = array<i64: 8, 256, 32>}, {transform_indices = @transform_1, window_bounds = array<i64: 8, 32>}]} {
    %c0_i32 = arith.constant 0 : i32
    %0 = arith.cmpi eq, %arg1, %c0_i32 : i32
    %1 = arith.extui %0 : i1 to i32
    %c0_i32_0 = arith.constant 0 : i32
    %2 = arith.cmpi ne, %1, %c0_i32_0 : i32
    scf.if %2 {
      %cst_9 = arith.constant 0.000000e+00 : f32
      %20 = vector.broadcast %cst_9 : f32 to vector<8x32xf32>
      %c0_10 = arith.constant 0 : index
      %c0_11 = arith.constant 0 : index
      %21 = vector.load %arg4[%c0_10, %c0_11] : memref<8x32xf32, #tpu.memory_space<vmem>>, vector<8x32xf32>
      tpu.vector_store %arg4[%c0_10, %c0_11], %20 {strides = array<i32>} : memref<8x32xf32, #tpu.memory_space<vmem>>, vector<8x32xf32>,
    } else {
    }
    %c0 = arith.constant 0 : index
    %c0_1 = arith.constant 0 : index
    %c0_2 = arith.constant 0 : index
    %3 = vector.load %arg2[%c0, %c0_1, %c0_2] : memref<8x256x32xf32, #tpu.memory_space<vmem>>, vector<8x256x32xf32>
    %c256_i32 = arith.constant 256 : i32
    %4 = arith.muli %arg1, %c256_i32 : i32
    %c1000_i32 = arith.constant 1000 : i32
    %5 = arith.subi %c1000_i32, %4 : i32
    %6 = tpu.iota {dimensions = array<i32: 1>} : vector<1x256x1xi32>
    %7 = vector.broadcast %5 : i32 to vector<1x256x1xi32>
    %8 = arith.cmpi slt, %6, %7 : vector<1x256x1xi32>
    %cst = arith.constant 0.000000e+00 : f32
    %9 = vector.shape_cast %8 : vector<1x256x1xi1> to vector<1x256x1xi1>
    %10 = vector.broadcast %9 : vector<1x256x1xi1> to vector<8x256x32xi1>
    %11 = vector.broadcast %cst : f32 to vector<8x256x32xf32>
    %12 = arith.select %10, %3, %11 : vector<8x256x32xi1>, vector<8x256x32xf32>
    %c0_3 = arith.constant 0 : index
    %c0_4 = arith.constant 0 : index
    %13 = vector.load %arg4[%c0_3, %c0_4] : memref<8x32xf32, #tpu.memory_space<vmem>>, vector<8x32xf32>
    %cst_5 = arith.constant dense<0.000000e+00> : vector<8x32xf32>
    %14 = vector.multi_reduction <add>, %12, %cst_5 [1] : vector<8x256x32xf32> to vector<8x32xf32>
    %15 = arith.addf %13, %14 : vector<8x32xf32>
    %c0_6 = arith.constant 0 : index
    %c0_7 = arith.constant 0 : index
    %16 = vector.load %arg4[%c0_6, %c0_7] : memref<8x32xf32, #tpu.memory_space<vmem>>, vector<8x32xf32>
    tpu.vector_store %arg4[%c0_6, %c0_7], %15 {strides = array<i32>} : memref<8x32xf32, #tpu.memory_space<vmem>>, vector<8x32xf32>,
    %c3_i32 = arith.constant 3 : i32
    %17 = arith.cmpi eq, %arg1, %c3_i32 : i32
    %18 = arith.extui %17 : i1 to i32
    %c0_i32_8 = arith.constant 0 : i32
    %19 = arith.cmpi ne, %18, %c0_i32_8 : i32
    scf.if %19 {
      %c0_9 = arith.constant 0 : index
      %c0_10 = arith.constant 0 : index
      %20 = vector.load %arg4[%c0_9, %c0_10] : memref<8x32xf32, #tpu.memory_space<vmem>>, vector<8x32xf32>
      %cst_11 = arith.constant 1.000000e-03 : f32
      %21 = vector.broadcast %cst_11 : f32 to vector<8x32xf32>
      %22 = arith.mulf %20, %21 : vector<8x32xf32>
      %c0_12 = arith.constant 0 : index
      %c0_13 = arith.constant 0 : index
      %23 = vector.load %arg3[%c0_12, %c0_13] : memref<8x32xf32, #tpu.memory_space<vmem>>, vector<8x32xf32>
      tpu.vector_store %arg3[%c0_12, %c0_13], %22 {strides = array<i32>} : memref<8x32xf32, #tpu.memory_space<vmem>>, vector<8x32xf32>,
    } else {
    }
    return
  }
  func.func @transform_0(%arg0: i32, %arg1: i32) -> (i32, i32, i32) {
    %c0_i32 = arith.constant 0 : i32
    %c0_i32_0 = arith.constant 0 : i32
    return %arg0, %arg1, %c0_i32 : i32, i32, i32
  }
  func.func @transform_1(%arg0: i32, %arg1: i32) -> (i32, i32) {
    %c0_i32 = arith.constant 0 : i32
    %c0_i32_0 = arith.constant 0 : i32
    return %arg0, %c0_i32 : i32, i32
  }
}

</mosaic_0001>

<llo_original>
// kernel: tpu_custom_call.1
$region0: #{tpu_custom_call.1}
  #allocation0 [shape = 'u32[]', space=smem, size = 0x4, offset = 0x4, fixed_abs, tag = 'smem constant byte address 0x4 - core index']
  #allocation1 [shape = 'u32[72,128]{1,0:T(1,128)}', space=vmem, size = 0x9000, scoped, tag = 'internal scratch']
  #allocation2 [shape = 'f32[8,32]{1,0:T(8,128)}', space=vmem, size = 0x1000, scoped, tag = 'scratch operand']
  %s0 = inlined_call_operand.vmem [shape: f32[16,1000,32], index: 0, kind: input, shape index: {}]
  %s1 = inlined_call_operand.hbm [shape: f32[16,32], index: 1, kind: output, shape index: {}]
  %s2 = sld [smem:[#allocation0]]
  $region97: #{tpu_custom_call.1} parent=0
    _
  %s4 = ssub.s32 1, %s2
  %s5 = scalar_select 0, %s4, %s2
  $region1: #{tpu_custom_call.1} parent=0
    #allocation3 [shape = 'u8[2097152]{0}', space=vmem, size = 0x200000, scoped, tag = 'input window, operand 0']
    #allocation4 [shape = 'u8[8192]{0}', space=vmem, size = 0x2000, scoped, tag = 'output window, operand 0']
    #allocation5 [shape = 's32[2]{0}', space=sflag, size = 0x8, scoped, tag = 'scoped memory for tpu_custom_call.1']
    %6 = vsyncpa [#allocation5], 0
    %s7 = scalar_lea.sflag [#allocation5], 1
    %8 = vsyncpa %s7, 0
    loop: start=0, step=1, limit=10
    $region2: #{tpu_custom_call.1} parent=1 // loop_pre_header
      _
    $region3: #{tpu_custom_call.1} parent=1 // loop_header
      %s10 = sphi 0, %s14
      %p11 = scmp.ge.s32.totalorder %s10, 10
      %s17 = sphi 0, %s29
      %s18 = sphi 0, %s25
      %s19 = sphi 0, %s17
      %s20 = sphi 0, %s18
      %s21 = sphi 0, %s19
      %s22 = sphi 0, %s20
      %s34 = sphi 0, %s36
      %s37 = sphi 0, %s34
      %s38 = sphi 0, %s37
      %s54 = sphi 0, %s38
      %s60 = sphi 0, %s62
      %s63 = sphi 0, %s60
      %s64 = sphi 0, %s63
      %s80 = sphi 0, %s64
    $region4: #{tpu_custom_call.1} parent=1 // loop_header_branch
      %13 = sbr.rel (%p11) target = $region8
    $region5: #{tpu_custom_call.1} parent=1 // loop_body
      %s15 = ssub.s32 %s10, 1
      %s16 = ssub.s32 %s10, 2
      %s23 = sadd.s32 1, %s18
      %p24 = scmp.ge.s32.totalorder %s23, 4
      %s25 = scalar_select %p24, 0, %s23
      %s26 = sadd.s32 1, %s17
      %s27 = scalar_select %p24, %s26, %s17
      %p28 = scmp.ge.s32.totalorder %s27, 2
      %s29 = scalar_select %p28, 0, %s27
      %s30 = ssub.s32 %s17, %s29
      %s31 = ssub.s32 %s18, %s25
      %s32 = sor.u32 %s30, %s31
      %p33 = scmp.eq.s32.totalorder %s32, 0
      %s35 = sadd.s32 %s34, 1
      %s36 = scalar_select %p33, %s34, %s35
      %p39 = pneg %p33
      %p40 = scmp.eq.s32.totalorder %s10, 7
      %p41 = por %p39, %p40
      %p42 = scmp.ne.s32.totalorder %s34, %s37
      %p43 = scmp.eq.s32.totalorder %s10, 0
      %p44 = por %p42, %p43
      %p45 = scmp.ne.s32.totalorder %s34, %s37
      %p46 = scmp.eq.s32.totalorder %s15, 7
      %p47 = por %p45, %p46
      %p48 = scmp.ne.s32.totalorder %s37, %s38
      %p49 = scmp.eq.s32.totalorder %s15, 0
      %p50 = por %p48, %p49
      %p51 = scmp.ne.s32.totalorder %s37, %s38
      %p52 = scmp.eq.s32.totalorder %s16, 7
      %p53 = por %p51, %p52
      %p55 = scmp.ne.s32.totalorder %s38, %s54
      %p56 = scmp.eq.s32.totalorder %s16, 0
      %p57 = por %p55, %p56
      %s58 = ssub.s32 %s17, %s29
      %p59 = scmp.eq.s32.totalorder %s58, 0
      %s61 = sadd.s32 %s60, 1
      %s62 = scalar_select %p59, %s60, %s61
      %p65 = pneg %p59
      %p66 = scmp.eq.s32.totalorder %s10, 7
      %p67 = por %p65, %p66
      %p68 = scmp.ne.s32.totalorder %s60, %s63
      %p69 = scmp.eq.s32.totalorder %s10, 0
      %p70 = por %p68, %p69
      %p71 = scmp.ne.s32.totalorder %s60, %s63
      %p72 = scmp.eq.s32.totalorder %s15, 7
      %p73 = por %p71, %p72
      %p74 = scmp.ne.s32.totalorder %s63, %s64
      %p75 = scmp.eq.s32.totalorder %s15, 0
      %p76 = por %p74, %p75
      %p77 = scmp.ne.s32.totalorder %s63, %s64
      %p78 = scmp.eq.s32.totalorder %s16, 7
      %p79 = por %p77, %p78
      %p81 = scmp.ne.s32.totalorder %s64, %s80
      %p82 = scmp.eq.s32.totalorder %s16, 0
      %p83 = por %p81, %p82
      %p84 = scmp.le.s32.totalorder 1, %s10
      %p85 = scmp.lt.s32.totalorder %s10, 9
      %p86 = pnand %p84, %p85
      %p87 = pneg %p86
      // Predicated region
      $region9: #{tpu_custom_call.1} parent=5 // pred_check
        _
      $region10: #{tpu_custom_call.1} parent=5 // pred_check_branch
        %89 = sbr.rel (%p86) target = $region12
      $region11: #{tpu_custom_call.1} parent=5 // pred_region
        %s90 = ssub.s32 %s10, 1
      $region12: #{tpu_custom_call.1} parent=5 // pred_fallthru
        _
      %p91 = scmp.lt.s32.totalorder %s10, 8
      // Predicated region
      $region13: #{tpu_custom_call.1} parent=5 // pred_check
        %p92 = pneg %p91
      $region14: #{tpu_custom_call.1} parent=5 // pred_check_branch
        %94 = sbr.rel (%p92) target = $region16
      $region15: #{tpu_custom_call.1} parent=5 // pred_region
        // Predicated region
        $region17: #{tpu_custom_call.1} parent=15 // pred_check
          %p95 = pneg %p44
        $region18: #{tpu_custom_call.1} parent=15 // pred_check_branch
          %97 = sbr.rel (%p95) target = $region20
        $region19: #{tpu_custom_call.1} parent=15 // pred_region
          %s98 = sand.u32 %s34, 1
          %s99 = sand.u32 %s34, 1
          %s100 = smul.addr %s99, 2048
          %s101 = scalar_lea.vmem [#allocation3], %s100
          %s102 = smul.u32 8, %s17
          %s103 = smul.u32 32, %s18
          %s104 = ssub.s32 125, %s103
          %p105 = scmp.lt.s32.totalorder %s104, 32
          %s106 = scalar_select %p105, %s104, 32
          %s107 = smul.u32 64, %s106
          %p108 = scmp.ne.s32.totalorder 0, %s107
          %s109 = smul.addr %s102, 125
          %s110 = sadd.s32 %s103, %s109
          %s111 = smul.addr %s110, 8
          %s112 = scalar_lea.vmem %s0, %s111
          // Predicated region
          $region21: #{tpu_custom_call.1} parent=19 // pred_check
            %p113 = pneg %p108
          $region22: #{tpu_custom_call.1} parent=19 // pred_check_branch
            %115 = sbr.rel (%p113) target = $region24
          $region23: #{tpu_custom_call.1} parent=19 // pred_region
            // Predicated region
            $region25: #{tpu_custom_call.1} parent=23 // pred_check
              _
            $region26: #{tpu_custom_call.1} parent=23 // pred_check_branch
              %117 = sbr.rel (0) target = $region28
            $region27: #{tpu_custom_call.1} parent=23 // pred_region
              // Predicated region
              $region47: #{tpu_custom_call.1} parent=27 // pred_check
                _
              $region48: #{tpu_custom_call.1} parent=27 // pred_check_branch
                %243 = sbr.rel (0) target = $region50
              $region49: #{tpu_custom_call.1} parent=27 // pred_region
                %s244 = sshrl.u32 %s106, 2
                // While loop
                $region51: #{tpu_custom_call.1} parent=49 // loop_pre_header
                  _
                $region52: #{tpu_custom_call.1} parent=49 // loop_header
                  %s246 = sphi 0, %s248
                  %p247 = scmp.ge.s32.totalorder %s246, %s244
                  %s251 = sphi 0, %s320
                  %s252 = sphi %s112, %s323
                  %s253 = sphi %s101, %s324
                $region53: #{tpu_custom_call.1} parent=49 // loop_header_branch
                  %250 = sbr.rel (%p247) target = $region57
                $region54: #{tpu_custom_call.1} parent=49 // loop_body
                  %v254 = vld [vmem:[%s252] sm:$0xff]
                  %255 = vst [vmem:[%s253] sm:$0xff] %v254
                  %v256 = vld [vmem:[%s252 + $0x8] sm:$0xff]
                  %257 = vst [vmem:[%s253 + $0x8] sm:$0xff] %v256
                  %v258 = vld [vmem:[%s252 + $0x10] sm:$0xff]
                  %259 = vst [vmem:[%s253 + $0x10] sm:$0xff] %v258
                  %v260 = vld [vmem:[%s252 + $0x18] sm:$0xff]
                  %261 = vst [vmem:[%s253 + $0x18] sm:$0xff] %v260
                  %v262 = vld [vmem:[%s252 + $0x3e8] sm:$0xff]
                  %263 = vst [vmem:[%s253 + $0x100] sm:$0xff] %v262
                  %v264 = vld [vmem:[%s252 + $0x3f0] sm:$0xff]
                  %265 = vst [vmem:[%s253 + $0x108] sm:$0xff] %v264
                  %v266 = vld [vmem:[%s252 + $0x3f8] sm:$0xff]
                  %267 = vst [vmem:[%s253 + $0x110] sm:$0xff] %v266
                  %v268 = vld [vmem:[%s252 + $0x400] sm:$0xff]
                  %269 = vst [vmem:[%s253 + $0x118] sm:$0xff] %v268
                  %v270 = vld [vmem:[%s252 + $0x7d0] sm:$0xff]
                  %271 = vst [vmem:[%s253 + $0x200] sm:$0xff] %v270
                  %v272 = vld [vmem:[%s252 + $0x7d8] sm:$0xff]
                  %273 = vst [vmem:[%s253 + $0x208] sm:$0xff] %v272
                  %v274 = vld [vmem:[%s252 + $0x7e0] sm:$0xff]
                  %275 = vst [vmem:[%s253 + $0x210] sm:$0xff] %v274
                  %v276 = vld [vmem:[%s252 + $0x7e8] sm:$0xff]
                  %277 = vst [vmem:[%s253 + $0x218] sm:$0xff] %v276
                  %v278 = vld [vmem:[%s252 + $0xbb8] sm:$0xff]
                  %279 = vst [vmem:[%s253 + $0x300] sm:$0xff] %v278
                  %v280 = vld [vmem:[%s252 + $0xbc0] sm:$0xff]
                  %281 = vst [vmem:[%s253 + $0x308] sm:$0xff] %v280
                  %v282 = vld [vmem:[%s252 + $0xbc8] sm:$0xff]
                  %283 = vst [vmem:[%s253 + $0x310] sm:$0xff] %v282
                  %v284 = vld [vmem:[%s252 + $0xbd0] sm:$0xff]
                  %285 = vst [vmem:[%s253 + $0x318] sm:$0xff] %v284
                  %v286 = vld [vmem:[%s252 + $0xfa0] sm:$0xff]
                  %287 = vst [vmem:[%s253 + $0x400] sm:$0xff] %v286
                  %v288 = vld [vmem:[%s252 + $0xfa8] sm:$0xff]
                  %289 = vst [vmem:[%s253 + $0x408] sm:$0xff] %v288
                  %v290 = vld [vmem:[%s252 + $0xfb0] sm:$0xff]
                  %291 = vst [vmem:[%s253 + $0x410] sm:$0xff] %v290
                  %v292 = vld [vmem:[%s252 + $0xfb8] sm:$0xff]
                  %293 = vst [vmem:[%s253 + $0x418] sm:$0xff] %v292
                  %v294 = vld [vmem:[%s252 + $0x1388] sm:$0xff]
                  %295 = vst [vmem:[%s253 + $0x500] sm:$0xff] %v294
                  %v296 = vld [vmem:[%s252 + $0x1390] sm:$0xff]
                  %297 = vst [vmem:[%s253 + $0x508] sm:$0xff] %v296
                  %v298 = vld [vmem:[%s252 + $0x1398] sm:$0xff]
                  %299 = vst [vmem:[%s253 + $0x510] sm:$0xff] %v298
                  %v300 = vld [vmem:[%s252 + $0x13a0] sm:$0xff]
                  %301 = vst [vmem:[%s253 + $0x518] sm:$0xff] %v300
                  %v302 = vld [vmem:[%s252 + $0x1770] sm:$0xff]
                  %303 = vst [vmem:[%s253 + $0x600] sm:$0xff] %v302
                  %v304 = vld [vmem:[%s252 + $0x1778] sm:$0xff]
                  %305 = vst [vmem:[%s253 + $0x608] sm:$0xff] %v304
                  %v306 = vld [vmem:[%s252 + $0x1780] sm:$0xff]
                  %307 = vst [vmem:[%s253 + $0x610] sm:$0xff] %v306
                  %v308 = vld [vmem:[%s252 + $0x1788] sm:$0xff]
                  %309 = vst [vmem:[%s253 + $0x618] sm:$0xff] %v308
                  %v310 = vld [vmem:[%s252 + $0x1b58] sm:$0xff]
                  %311 = vst [vmem:[%s253 + $0x700] sm:$0xff] %v310
                  %v312 = vld [vmem:[%s252 + $0x1b60] sm:$0xff]
                  %313 = vst [vmem:[%s253 + $0x708] sm:$0xff] %v312
                  %v314 = vld [vmem:[%s252 + $0x1b68] sm:$0xff]
                  %315 = vst [vmem:[%s253 + $0x710] sm:$0xff] %v314
                  %v316 = vld [vmem:[%s252 + $0x1b70] sm:$0xff]
                  %317 = vst [vmem:[%s253 + $0x718] sm:$0xff] %v316
                  %s318 = sadd.s32 1, %s251
                  %p319 = scmp.ge.s32.totalorder %s318, %s244
                  %s320 = scalar_select %p319, 0, %s318
                  %s321 = smul.u32 %s320, 32
                  %s322 = smul.u32 %s320, 32
                  %s323 = scalar_lea.vmem %s112, %s321
                  %s324 = scalar_lea.vmem %s101, %s322 [#allocation3]
                $region55: #{tpu_custom_call.1} parent=49 // loop_footer
                  %s248 = sadd.s32 %s246, 1
                $region56: #{tpu_custom_call.1} parent=49 // loop_footer_branch
                  %245 = sbr.rel target = $region52
                $region57: #{tpu_custom_call.1} parent=49 // loop_exit
                  _
                %s325 = sshrl.u32 %s106, 2
                %s326 = sand.u32 %s106, 3
                %s327 = smul.u32 %s325, 4
                %s328 = smul.u32 8, %s327
                %s329 = scalar_lea.vmem %s112, %s328
                %s330 = smul.u32 8, %s327
                %s331 = scalar_lea.vmem %s101, %s330 [#allocation3]
                // While loop
                $region58: #{tpu_custom_call.1} parent=49 // loop_pre_header
                  _
                $region59: #{tpu_custom_call.1} parent=49 // loop_header
                  %s333 = sphi 0, %s335
                  %p334 = scmp.ge.s32.totalorder %s333, %s326
                  %s338 = sphi 0, %s359
                  %s339 = sphi %s329, %s362
                  %s340 = sphi %s331, %s363
                $region60: #{tpu_custom_call.1} parent=49 // loop_header_branch
                  %337 = sbr.rel (%p334) target = $region64
                $region61: #{tpu_custom_call.1} parent=49 // loop_body
                  %v341 = vld [vmem:[%s339] sm:$0xff]
                  %342 = vst [vmem:[%s340] sm:$0xff] %v341
                  %v343 = vld [vmem:[%s339 + $0x3e8] sm:$0xff]
                  %344 = vst [vmem:[%s340 + $0x100] sm:$0xff] %v343
                  %v345 = vld [vmem:[%s339 + $0x7d0] sm:$0xff]
                  %346 = vst [vmem:[%s340 + $0x200] sm:$0xff] %v345
                  %v347 = vld [vmem:[%s339 + $0xbb8] sm:$0xff]
                  %348 = vst [vmem:[%s340 + $0x300] sm:$0xff] %v347
                  %v349 = vld [vmem:[%s339 + $0xfa0] sm:$0xff]
                  %350 = vst [vmem:[%s340 + $0x400] sm:$0xff] %v349
                  %v351 = vld [vmem:[%s339 + $0x1388] sm:$0xff]
                  %352 = vst [vmem:[%s340 + $0x500] sm:$0xff] %v351
                  %v353 = vld [vmem:[%s339 + $0x1770] sm:$0xff]
                  %354 = vst [vmem:[%s340 + $0x600] sm:$0xff] %v353
                  %v355 = vld [vmem:[%s339 + $0x1b58] sm:$0xff]
                  %356 = vst [vmem:[%s340 + $0x700] sm:$0xff] %v355
                  %s357 = sadd.s32 1, %s338
                  %p358 = scmp.ge.s32.totalorder %s357, %s326
                  %s359 = scalar_select %p358, 0, %s357
                  %s360 = smul.u32 %s359, 8
                  %s361 = smul.u32 %s359, 8
                  %s362 = scalar_lea.vmem %s329, %s360
                  %s363 = scalar_lea.vmem %s331, %s361 [#allocation3]
                $region62: #{tpu_custom_call.1} parent=49 // loop_footer
                  %s335 = sadd.s32 %s333, 1
                $region63: #{tpu_custom_call.1} parent=49 // loop_footer_branch
                  %332 = sbr.rel target = $region59
                $region64: #{tpu_custom_call.1} parent=49 // loop_exit
                  _
              $region50: #{tpu_custom_call.1} parent=27 // pred_fallthru
                _
              // Predicated region
              $region65: #{tpu_custom_call.1} parent=27 // pred_check
                _
              $region66: #{tpu_custom_call.1} parent=27 // pred_check_branch
                %365 = sbr.rel target = $region68
              $region67: #{tpu_custom_call.1} parent=27 // pred_region
                _
              $region68: #{tpu_custom_call.1} parent=27 // pred_fallthru
                _
            $region28: #{tpu_custom_call.1} parent=23 // pred_fallthru
              _
            // Predicated region
            $region29: #{tpu_custom_call.1} parent=23 // pred_check
              _
            $region30: #{tpu_custom_call.1} parent=23 // pred_check_branch
              %119 = sbr.rel target = $region32
            $region31: #{tpu_custom_call.1} parent=23 // pred_region
              %s121 = ssub.s32 256, 1
              %s122 = sshrl.u32 %s106, 2
              // While loop
              $region33: #{tpu_custom_call.1} parent=31 // loop_pre_header
                _
              $region34: #{tpu_custom_call.1} parent=31 // loop_header
                %s124 = sphi 0, %s126
                %p125 = scmp.ge.s32.totalorder %s124, %s122
                %s129 = sphi 0, %s198
                %s130 = sphi %s112, %s201
                %s131 = sphi %s101, %s202
              $region35: #{tpu_custom_call.1} parent=31 // loop_header_branch
                %128 = sbr.rel (%p125) target = $region39
              $region36: #{tpu_custom_call.1} parent=31 // loop_body
                %v132 = vld [vmem:[%s130] sm:%s121]
                %133 = vst [vmem:[%s131] sm:%s121] %v132
                %v134 = vld [vmem:[%s130 + $0x8] sm:%s121]
                %135 = vst [vmem:[%s131 + $0x8] sm:%s121] %v134
                %v136 = vld [vmem:[%s130 + $0x10] sm:%s121]
                %137 = vst [vmem:[%s131 + $0x10] sm:%s121] %v136
                %v138 = vld [vmem:[%s130 + $0x18] sm:%s121]
                %139 = vst [vmem:[%s131 + $0x18] sm:%s121] %v138
                %v140 = vld [vmem:[%s130 + $0x3e8] sm:%s121]
                %141 = vst [vmem:[%s131 + $0x100] sm:%s121] %v140
                %v142 = vld [vmem:[%s130 + $0x3f0] sm:%s121]
                %143 = vst [vmem:[%s131 + $0x108] sm:%s121] %v142
                %v144 = vld [vmem:[%s130 + $0x3f8] sm:%s121]
                %145 = vst [vmem:[%s131 + $0x110] sm:%s121] %v144
                %v146 = vld [vmem:[%s130 + $0x400] sm:%s121]
                %147 = vst [vmem:[%s131 + $0x118] sm:%s121] %v146
                %v148 = vld [vmem:[%s130 + $0x7d0] sm:%s121]
                %149 = vst [vmem:[%s131 + $0x200] sm:%s121] %v148
                %v150 = vld [vmem:[%s130 + $0x7d8] sm:%s121]
                %151 = vst [vmem:[%s131 + $0x208] sm:%s121] %v150
                %v152 = vld [vmem:[%s130 + $0x7e0] sm:%s121]
                %153 = vst [vmem:[%s131 + $0x210] sm:%s121] %v152
                %v154 = vld [vmem:[%s130 + $0x7e8] sm:%s121]
                %155 = vst [vmem:[%s131 + $0x218] sm:%s121] %v154
                %v156 = vld [vmem:[%s130 + $0xbb8] sm:%s121]
                %157 = vst [vmem:[%s131 + $0x300] sm:%s121] %v156
                %v158 = vld [vmem:[%s130 + $0xbc0] sm:%s121]
                %159 = vst [vmem:[%s131 + $0x308] sm:%s121] %v158
                %v160 = vld [vmem:[%s130 + $0xbc8] sm:%s121]
                %161 = vst [vmem:[%s131 + $0x310] sm:%s121] %v160
                %v162 = vld [vmem:[%s130 + $0xbd0] sm:%s121]
                %163 = vst [vmem:[%s131 + $0x318] sm:%s121] %v162
                %v164 = vld [vmem:[%s130 + $0xfa0] sm:%s121]
                %165 = vst [vmem:[%s131 + $0x400] sm:%s121] %v164
                %v166 = vld [vmem:[%s130 + $0xfa8] sm:%s121]
                %167 = vst [vmem:[%s131 + $0x408] sm:%s121] %v166
                %v168 = vld [vmem:[%s130 + $0xfb0] sm:%s121]
                %169 = vst [vmem:[%s131 + $0x410] sm:%s121] %v168
                %v170 = vld [vmem:[%s130 + $0xfb8] sm:%s121]
                %171 = vst [vmem:[%s131 + $0x418] sm:%s121] %v170
                %v172 = vld [vmem:[%s130 + $0x1388] sm:%s121]
                %173 = vst [vmem:[%s131 + $0x500] sm:%s121] %v172
                %v174 = vld [vmem:[%s130 + $0x1390] sm:%s121]
                %175 = vst [vmem:[%s131 + $0x508] sm:%s121] %v174
                %v176 = vld [vmem:[%s130 + $0x1398] sm:%s121]
                %177 = vst [vmem:[%s131 + $0x510] sm:%s121] %v176
                %v178 = vld [vmem:[%s130 + $0x13a0] sm:%s121]
                %179 = vst [vmem:[%s131 + $0x518] sm:%s121] %v178
                %v180 = vld [vmem:[%s130 + $0x1770] sm:%s121]
                %181 = vst [vmem:[%s131 + $0x600] sm:%s121] %v180
                %v182 = vld [vmem:[%s130 + $0x1778] sm:%s121]
                %183 = vst [vmem:[%s131 + $0x608] sm:%s121] %v182
                %v184 = vld [vmem:[%s130 + $0x1780] sm:%s121]
                %185 = vst [vmem:[%s131 + $0x610] sm:%s121] %v184
                %v186 = vld [vmem:[%s130 + $0x1788] sm:%s121]
                %187 = vst [vmem:[%s131 + $0x618] sm:%s121] %v186
                %v188 = vld [vmem:[%s130 + $0x1b58] sm:%s121]
                %189 = vst [vmem:[%s131 + $0x700] sm:%s121] %v188
                %v190 = vld [vmem:[%s130 + $0x1b60] sm:%s121]
                %191 = vst [vmem:[%s131 + $0x708] sm:%s121] %v190
                %v192 = vld [vmem:[%s130 + $0x1b68] sm:%s121]
                %193 = vst [vmem:[%s131 + $0x710] sm:%s121] %v192
                %v194 = vld [vmem:[%s130 + $0x1b70] sm:%s121]
                %195 = vst [vmem:[%s131 + $0x718] sm:%s121] %v194
                %s196 = sadd.s32 1, %s129
                %p197 = scmp.ge.s32.totalorder %s196, %s122
                %s198 = scalar_select %p197, 0, %s196
                %s199 = smul.u32 %s198, 32
                %s200 = smul.u32 %s198, 32
                %s201 = scalar_lea.vmem %s112, %s199
                %s202 = scalar_lea.vmem %s101, %s200 [#allocation3]
              $region37: #{tpu_custom_call.1} parent=31 // loop_footer
                %s126 = sadd.s32 %s124, 1
              $region38: #{tpu_custom_call.1} parent=31 // loop_footer_branch
                %123 = sbr.rel target = $region34
              $region39: #{tpu_custom_call.1} parent=31 // loop_exit
                _
              %s203 = sshrl.u32 %s106, 2
              %s204 = sand.u32 %s106, 3
              %s205 = smul.u32 %s203, 4
              %s206 = smul.u32 8, %s205
              %s207 = scalar_lea.vmem %s112, %s206
              %s208 = smul.u32 8, %s205
              %s209 = scalar_lea.vmem %s101, %s208 [#allocation3]
              // While loop
              $region40: #{tpu_custom_call.1} parent=31 // loop_pre_header
                _
              $region41: #{tpu_custom_call.1} parent=31 // loop_header
                %s211 = sphi 0, %s213
                %p212 = scmp.ge.s32.totalorder %s211, %s204
                %s216 = sphi 0, %s237
                %s217 = sphi %s207, %s240
                %s218 = sphi %s209, %s241
              $region42: #{tpu_custom_call.1} parent=31 // loop_header_branch
                %215 = sbr.rel (%p212) target = $region46
              $region43: #{tpu_custom_call.1} parent=31 // loop_body
                %v219 = vld [vmem:[%s217] sm:%s121]
                %220 = vst [vmem:[%s218] sm:%s121] %v219
                %v221 = vld [vmem:[%s217 + $0x3e8] sm:%s121]
                %222 = vst [vmem:[%s218 + $0x100] sm:%s121] %v221
                %v223 = vld [vmem:[%s217 + $0x7d0] sm:%s121]
                %224 = vst [vmem:[%s218 + $0x200] sm:%s121] %v223
                %v225 = vld [vmem:[%s217 + $0xbb8] sm:%s121]
                %226 = vst [vmem:[%s218 + $0x300] sm:%s121] %v225
                %v227 = vld [vmem:[%s217 + $0xfa0] sm:%s121]
                %228 = vst [vmem:[%s218 + $0x400] sm:%s121] %v227
                %v229 = vld [vmem:[%s217 + $0x1388] sm:%s121]
                %230 = vst [vmem:[%s218 + $0x500] sm:%s121] %v229
                %v231 = vld [vmem:[%s217 + $0x1770] sm:%s121]
                %232 = vst [vmem:[%s218 + $0x600] sm:%s121] %v231
                %v233 = vld [vmem:[%s217 + $0x1b58] sm:%s121]
                %234 = vst [vmem:[%s218 + $0x700] sm:%s121] %v233
                %s235 = sadd.s32 1, %s216
                %p236 = scmp.ge.s32.totalorder %s235, %s204
                %s237 = scalar_select %p236, 0, %s235
                %s238 = smul.u32 %s237, 8
                %s239 = smul.u32 %s237, 8
                %s240 = scalar_lea.vmem %s207, %s238
                %s241 = scalar_lea.vmem %s209, %s239 [#allocation3]
              $region44: #{tpu_custom_call.1} parent=31 // loop_footer
                %s213 = sadd.s32 %s211, 1
              $region45: #{tpu_custom_call.1} parent=31 // loop_footer_branch
                %210 = sbr.rel target = $region41
              $region46: #{tpu_custom_call.1} parent=31 // loop_exit
                _
            $region32: #{tpu_custom_call.1} parent=23 // pred_fallthru
              _
          $region24: #{tpu_custom_call.1} parent=19 // pred_fallthru
            _
          %366 = vnop
        $region20: #{tpu_custom_call.1} parent=15 // pred_fallthru
          _
      $region16: #{tpu_custom_call.1} parent=5 // pred_fallthru
        _
      %p367 = scmp.le.s32.totalorder 1, %s10
      %p368 = scmp.lt.s32.totalorder %s10, 9
      %p369 = pnand %p367, %p368
      %p370 = pneg %p369
      // Predicated region
      $region69: #{tpu_custom_call.1} parent=5 // pred_check
        _
      $region70: #{tpu_custom_call.1} parent=5 // pred_check_branch
        %372 = sbr.rel (%p369) target = $region72
      $region71: #{tpu_custom_call.1} parent=5 // pred_region
        %s373 = ssub.s32 %s10, 1
        %s374 = sand.u32 %s37, 1
        %s375 = sand.u32 %s37, 1
        %s376 = smul.addr %s375, 2048
        %s377 = scalar_lea.vmem [#allocation3], %s376
        // Predicated region
        $region73: #{tpu_custom_call.1} parent=71 // pred_check
          %p378 = pneg %p50
        $region74: #{tpu_custom_call.1} parent=71 // pred_check_branch
          %380 = sbr.rel (%p378) target = $region76
        $region75: #{tpu_custom_call.1} parent=71 // pred_region
          _
        $region76: #{tpu_custom_call.1} parent=71 // pred_fallthru
          _
        %s381 = sand.u32 %s37, 1
        %s382 = sand.u32 %s37, 1
        %s383 = smul.addr %s382, 2048
        %s384 = scalar_lea.vmem [#allocation3], %s383
        %p385 = pneg %p50
        %p386 = pneg %p47
        %p387 = pneg %p76
        %p388 = pneg %p73
        %s389 = sand.u32 %s63, 1
        %s390 = scalar_lea.sflag [#allocation5], %s389
        %s391 = sand.u32 %s63, 1
        %s392 = smul.addr %s391, 8
        %s393 = scalar_lea.vmem [#allocation4], %s392
        %s394 = smul.u32 8, %s19
        %s395 = smul.u32 32, %s20
        %s396 = ssub.s32 125, %s395
        %p397 = scmp.lt.s32.totalorder %s396, 32
        %s398 = scalar_select %p397, %s396, 32
        %s399 = smul.u32 64, %s398
        %p400 = scmp.eq.s32.totalorder %s20, 0
        // Predicated region
        $region77: #{tpu_custom_call.1} parent=71 // pred_check
          %p401 = pneg %p400
        $region78: #{tpu_custom_call.1} parent=71 // pred_check_branch
          %403 = sbr.rel (%p401) target = $region80
        $region79: #{tpu_custom_call.1} parent=71 // pred_region
          %vm404 = vcmask 261120
          %405 = vst.msk [vmem:[#allocation2] sm:$0xff] %vm404, 0.0
        $region80: #{tpu_custom_call.1} parent=71 // pred_fallthru
          _
        %v406 = vld [vmem:[%s377] sm:$0xff]
        %v407 = vld [vmem:[%s377 + $0x8] sm:$0xff]
        %v408 = vld [vmem:[%s377 + $0x10] sm:$0xff]
        %v409 = vld [vmem:[%s377 + $0x18] sm:$0xff]
        %v410 = vld [vmem:[%s377 + $0x20] sm:$0xff]
        %v411 = vld [vmem:[%s377 + $0x28] sm:$0xff]
        %v412 = vld [vmem:[%s377 + $0x30] sm:$0xff]
        %v413 = vld [vmem:[%s377 + $0x38] sm:$0xff]
        %v414 = vld [vmem:[%s377 + $0x40] sm:$0xff]
        %v415 = vld [vmem:[%s377 + $0x48] sm:$0xff]
        %v416 = vld [vmem:[%s377 + $0x50] sm:$0xff]
        %v417 = vld [vmem:[%s377 + $0x58] sm:$0xff]
        %v418 = vld [vmem:[%s377 + $0x60] sm:$0xff]
        %v419 = vld [vmem:[%s377 + $0x68] sm:$0xff]
        %v420 = vld [vmem:[%s377 + $0x70] sm:$0xff]
        %v421 = vld [vmem:[%s377 + $0x78] sm:$0xff]
        %v422 = vld [vmem:[%s377 + $0x80] sm:$0xff]
        %v423 = vld [vmem:[%s377 + $0x88] sm:$0xff]
        %v424 = vld [vmem:[%s377 + $0x90] sm:$0xff]
        %v425 = vld [vmem:[%s377 + $0x98] sm:$0xff]
        %v426 = vld [vmem:[%s377 + $0xa0] sm:$0xff]
        %v427 = vld [vmem:[%s377 + $0xa8] sm:$0xff]
        %v428 = vld [vmem:[%s377 + $0xb0] sm:$0xff]
        %v429 = vld [vmem:[%s377 + $0xb8] sm:$0xff]
        %v430 = vld [vmem:[%s377 + $0xc0] sm:$0xff]
        %v431 = vld [vmem:[%s377 + $0xc8] sm:$0xff]
        %v432 = vld [vmem:[%s377 + $0xd0] sm:$0xff]
        %v433 = vld [vmem:[%s377 + $0xd8] sm:$0xff]
        %v434 = vld [vmem:[%s377 + $0xe0] sm:$0xff]
        %v435 = vld [vmem:[%s377 + $0xe8] sm:$0xff]
        %v436 = vld [vmem:[%s377 + $0xf0] sm:$0xff]
        %v437 = vld [vmem:[%s377 + $0xf8] sm:$0xff]
        %v438 = vld [vmem:[%s377 + $0x100] sm:$0xff]
        %v439 = vld [vmem:[%s377 + $0x108] sm:$0xff]
        %v440 = vld [vmem:[%s377 + $0x110] sm:$0xff]
        %v441 = vld [vmem:[%s377 + $0x118] sm:$0xff]
        %v442 = vld [vmem:[%s377 + $0x120] sm:$0xff]
        %v443 = vld [vmem:[%s377 + $0x128] sm:$0xff]
        %v444 = vld [vmem:[%s377 + $0x130] sm:$0xff]
        %v445 = vld [vmem:[%s377 + $0x138] sm:$0xff]
        %v446 = vld [vmem:[%s377 + $0x140] sm:$0xff]
        %v447 = vld [vmem:[%s377 + $0x148] sm:$0xff]
        %v448 = vld [vmem:[%s377 + $0x150] sm:$0xff]
        %v449 = vld [vmem:[%s377 + $0x158] sm:$0xff]
        %v450 = vld [vmem:[%s377 + $0x160] sm:$0xff]
        %v451 = vld [vmem:[%s377 + $0x168] sm:$0xff]
        %v452 = vld [vmem:[%s377 + $0x170] sm:$0xff]
        %v453 = vld [vmem:[%s377 + $0x178] sm:$0xff]
        %v454 = vld [vmem:[%s377 + $0x180] sm:$0xff]
        %v455 = vld [vmem:[%s377 + $0x188] sm:$0xff]
        %v456 = vld [vmem:[%s377 + $0x190] sm:$0xff]
        %v457 = vld [vmem:[%s377 + $0x198] sm:$0xff]
        %v458 = vld [vmem:[%s377 + $0x1a0] sm:$0xff]
        %v459 = vld [vmem:[%s377 + $0x1a8] sm:$0xff]
        %v460 = vld [vmem:[%s377 + $0x1b0] sm:$0xff]
        %v461 = vld [vmem:[%s377 + $0x1b8] sm:$0xff]
        %v462 = vld [vmem:[%s377 + $0x1c0] sm:$0xff]
        %v463 = vld [vmem:[%s377 + $0x1c8] sm:$0xff]
        %v464 = vld [vmem:[%s377 + $0x1d0] sm:$0xff]
        %v465 = vld [vmem:[%s377 + $0x1d8] sm:$0xff]
        %v466 = vld [vmem:[%s377 + $0x1e0] sm:$0xff]
        %v467 = vld [vmem:[%s377 + $0x1e8] sm:$0xff]
        %v468 = vld [vmem:[%s377 + $0x1f0] sm:$0xff]
        %v469 = vld [vmem:[%s377 + $0x1f8] sm:$0xff]
        %v470 = vld [vmem:[%s377 + $0x200] sm:$0xff]
        %v471 = vld [vmem:[%s377 + $0x208] sm:$0xff]
        %v472 = vld [vmem:[%s377 + $0x210] sm:$0xff]
        %v473 = vld [vmem:[%s377 + $0x218] sm:$0xff]
        %v474 = vld [vmem:[%s377 + $0x220] sm:$0xff]
        %v475 = vld [vmem:[%s377 + $0x228] sm:$0xff]
        %v476 = vld [vmem:[%s377 + $0x230] sm:$0xff]
        %v477 = vld [vmem:[%s377 + $0x238] sm:$0xff]
        %v478 = vld [vmem:[%s377 + $0x240] sm:$0xff]
        %v479 = vld [vmem:[%s377 + $0x248] sm:$0xff]
        %v480 = vld [vmem:[%s377 + $0x250] sm:$0xff]
        %v481 = vld [vmem:[%s377 + $0x258] sm:$0xff]
        %v482 = vld [vmem:[%s377 + $0x260] sm:$0xff]
        %v483 = vld [vmem:[%s377 + $0x268] sm:$0xff]
        %v484 = vld [vmem:[%s377 + $0x270] sm:$0xff]
        %v485 = vld [vmem:[%s377 + $0x278] sm:$0xff]
        %v486 = vld [vmem:[%s377 + $0x280] sm:$0xff]
        %v487 = vld [vmem:[%s377 + $0x288] sm:$0xff]
        %v488 = vld [vmem:[%s377 + $0x290] sm:$0xff]
        %v489 = vld [vmem:[%s377 + $0x298] sm:$0xff]
        %v490 = vld [vmem:[%s377 + $0x2a0] sm:$0xff]
        %v491 = vld [vmem:[%s377 + $0x2a8] sm:$0xff]
        %v492 = vld [vmem:[%s377 + $0x2b0] sm:$0xff]
        %v493 = vld [vmem:[%s377 + $0x2b8] sm:$0xff]
        %v494 = vld [vmem:[%s377 + $0x2c0] sm:$0xff]
        %v495 = vld [vmem:[%s377 + $0x2c8] sm:$0xff]
        %v496 = vld [vmem:[%s377 + $0x2d0] sm:$0xff]
        %v497 = vld [vmem:[%s377 + $0x2d8] sm:$0xff]
        %v498 = vld [vmem:[%s377 + $0x2e0] sm:$0xff]
        %v499 = vld [vmem:[%s377 + $0x2e8] sm:$0xff]
        %v500 = vld [vmem:[%s377 + $0x2f0] sm:$0xff]
        %v501 = vld [vmem:[%s377 + $0x2f8] sm:$0xff]
        %v502 = vld [vmem:[%s377 + $0x300] sm:$0xff]
        %v503 = vld [vmem:[%s377 + $0x308] sm:$0xff]
        %v504 = vld [vmem:[%s377 + $0x310] sm:$0xff]
        %v505 = vld [vmem:[%s377 + $0x318] sm:$0xff]
        %v506 = vld [vmem:[%s377 + $0x320] sm:$0xff]
        %v507 = vld [vmem:[%s377 + $0x328] sm:$0xff]
        %v508 = vld [vmem:[%s377 + $0x330] sm:$0xff]
        %v509 = vld [vmem:[%s377 + $0x338] sm:$0xff]
        %v510 = vld [vmem:[%s377 + $0x340] sm:$0xff]
        %v511 = vld [vmem:[%s377 + $0x348] sm:$0xff]
        %v512 = vld [vmem:[%s377 + $0x350] sm:$0xff]
        %v513 = vld [vmem:[%s377 + $0x358] sm:$0xff]
        %v514 = vld [vmem:[%s377 + $0x360] sm:$0xff]
        %v515 = vld [vmem:[%s377 + $0x368] sm:$0xff]
        %v516 = vld [vmem:[%s377 + $0x370] sm:$0xff]
        %v517 = vld [vmem:[%s377 + $0x378] sm:$0xff]
        %v518 = vld [vmem:[%s377 + $0x380] sm:$0xff]
        %v519 = vld [vmem:[%s377 + $0x388] sm:$0xff]
        %v520 = vld [vmem:[%s377 + $0x390] sm:$0xff]
        %v521 = vld [vmem:[%s377 + $0x398] sm:$0xff]
        %v522 = vld [vmem:[%s377 + $0x3a0] sm:$0xff]
        %v523 = vld [vmem:[%s377 + $0x3a8] sm:$0xff]
        %v524 = vld [vmem:[%s377 + $0x3b0] sm:$0xff]
        %v525 = vld [vmem:[%s377 + $0x3b8] sm:$0xff]
        %v526 = vld [vmem:[%s377 + $0x3c0] sm:$0xff]
        %v527 = vld [vmem:[%s377 + $0x3c8] sm:$0xff]
        %v528 = vld [vmem:[%s377 + $0x3d0] sm:$0xff]
        %v529 = vld [vmem:[%s377 + $0x3d8] sm:$0xff]
        %v530 = vld [vmem:[%s377 + $0x3e0] sm:$0xff]
        %v531 = vld [vmem:[%s377 + $0x3e8] sm:$0xff]
        %v532 = vld [vmem:[%s377 + $0x3f0] sm:$0xff]
        %v533 = vld [vmem:[%s377 + $0x3f8] sm:$0xff]
        %v534 = vld [vmem:[%s377 + $0x400] sm:$0xff]
        %v535 = vld [vmem:[%s377 + $0x408] sm:$0xff]
        %v536 = vld [vmem:[%s377 + $0x410] sm:$0xff]
        %v537 = vld [vmem:[%s377 + $0x418] sm:$0xff]
        %v538 = vld [vmem:[%s377 + $0x420] sm:$0xff]
        %v539 = vld [vmem:[%s377 + $0x428] sm:$0xff]
        %v540 = vld [vmem:[%s377 + $0x430] sm:$0xff]
        %v541 = vld [vmem:[%s377 + $0x438] sm:$0xff]
        %v542 = vld [vmem:[%s377 + $0x440] sm:$0xff]
        %v543 = vld [vmem:[%s377 + $0x448] sm:$0xff]
        %v544 = vld [vmem:[%s377 + $0x450] sm:$0xff]
        %v545 = vld [vmem:[%s377 + $0x458] sm:$0xff]
        %v546 = vld [vmem:[%s377 + $0x460] sm:$0xff]
        %v547 = vld [vmem:[%s377 + $0x468] sm:$0xff]
        %v548 = vld [vmem:[%s377 + $0x470] sm:$0xff]
        %v549 = vld [vmem:[%s377 + $0x478] sm:$0xff]
        %v550 = vld [vmem:[%s377 + $0x480] sm:$0xff]
        %v551 = vld [vmem:[%s377 + $0x488] sm:$0xff]
        %v552 = vld [vmem:[%s377 + $0x490] sm:$0xff]
        %v553 = vld [vmem:[%s377 + $0x498] sm:$0xff]
        %v554 = vld [vmem:[%s377 + $0x4a0] sm:$0xff]
        %v555 = vld [vmem:[%s377 + $0x4a8] sm:$0xff]
        %v556 = vld [vmem:[%s377 + $0x4b0] sm:$0xff]
        %v557 = vld [vmem:[%s377 + $0x4b8] sm:$0xff]
        %v558 = vld [vmem:[%s377 + $0x4c0] sm:$0xff]
        %v559 = vld [vmem:[%s377 + $0x4c8] sm:$0xff]
        %v560 = vld [vmem:[%s377 + $0x4d0] sm:$0xff]
        %v561 = vld [vmem:[%s377 + $0x4d8] sm:$0xff]
        %v562 = vld [vmem:[%s377 + $0x4e0] sm:$0xff]
        %v563 = vld [vmem:[%s377 + $0x4e8] sm:$0xff]
        %v564 = vld [vmem:[%s377 + $0x4f0] sm:$0xff]
        %v565 = vld [vmem:[%s377 + $0x4f8] sm:$0xff]
        %v566 = vld [vmem:[%s377 + $0x500] sm:$0xff]
        %v567 = vld [vmem:[%s377 + $0x508] sm:$0xff]
        %v568 = vld [vmem:[%s377 + $0x510] sm:$0xff]
        %v569 = vld [vmem:[%s377 + $0x518] sm:$0xff]
        %v570 = vld [vmem:[%s377 + $0x520] sm:$0xff]
        %v571 = vld [vmem:[%s377 + $0x528] sm:$0xff]
        %v572 = vld [vmem:[%s377 + $0x530] sm:$0xff]
        %v573 = vld [vmem:[%s377 + $0x538] sm:$0xff]
        %v574 = vld [vmem:[%s377 + $0x540] sm:$0xff]
        %v575 = vld [vmem:[%s377 + $0x548] sm:$0xff]
        %v576 = vld [vmem:[%s377 + $0x550] sm:$0xff]
        %v577 = vld [vmem:[%s377 + $0x558] sm:$0xff]
        %v578 = vld [vmem:[%s377 + $0x560] sm:$0xff]
        %v579 = vld [vmem:[%s377 + $0x568] sm:$0xff]
        %v580 = vld [vmem:[%s377 + $0x570] sm:$0xff]
        %v581 = vld [vmem:[%s377 + $0x578] sm:$0xff]
        %v582 = vld [vmem:[%s377 + $0x580] sm:$0xff]
        %v583 = vld [vmem:[%s377 + $0x588] sm:$0xff]
        %v584 = vld [vmem:[%s377 + $0x590] sm:$0xff]
        %v585 = vld [vmem:[%s377 + $0x598] sm:$0xff]
        %v586 = vld [vmem:[%s377 + $0x5a0] sm:$0xff]
        %v587 = vld [vmem:[%s377 + $0x5a8] sm:$0xff]
        %v588 = vld [vmem:[%s377 + $0x5b0] sm:$0xff]
        %v589 = vld [vmem:[%s377 + $0x5b8] sm:$0xff]
        %v590 = vld [vmem:[%s377 + $0x5c0] sm:$0xff]
        %v591 = vld [vmem:[%s377 + $0x5c8] sm:$0xff]
        %v592 = vld [vmem:[%s377 + $0x5d0] sm:$0xff]
        %v593 = vld [vmem:[%s377 + $0x5d8] sm:$0xff]
        %v594 = vld [vmem:[%s377 + $0x5e0] sm:$0xff]
        %v595 = vld [vmem:[%s377 + $0x5e8] sm:$0xff]
        %v596 = vld [vmem:[%s377 + $0x5f0] sm:$0xff]
        %v597 = vld [vmem:[%s377 + $0x5f8] sm:$0xff]
        %v598 = vld [vmem:[%s377 + $0x600] sm:$0xff]
        %v599 = vld [vmem:[%s377 + $0x608] sm:$0xff]
        %v600 = vld [vmem:[%s377 + $0x610] sm:$0xff]
        %v601 = vld [vmem:[%s377 + $0x618] sm:$0xff]
        %v602 = vld [vmem:[%s377 + $0x620] sm:$0xff]
        %v603 = vld [vmem:[%s377 + $0x628] sm:$0xff]
        %v604 = vld [vmem:[%s377 + $0x630] sm:$0xff]
        %v605 = vld [vmem:[%s377 + $0x638] sm:$0xff]
        %v606 = vld [vmem:[%s377 + $0x640] sm:$0xff]
        %v607 = vld [vmem:[%s377 + $0x648] sm:$0xff]
        %v608 = vld [vmem:[%s377 + $0x650] sm:$0xff]
        %v609 = vld [vmem:[%s377 + $0x658] sm:$0xff]
        %v610 = vld [vmem:[%s377 + $0x660] sm:$0xff]
        %v611 = vld [vmem:[%s377 + $0x668] sm:$0xff]
        %v612 = vld [vmem:[%s377 + $0x670] sm:$0xff]
        %v613 = vld [vmem:[%s377 + $0x678] sm:$0xff]
        %v614 = vld [vmem:[%s377 + $0x680] sm:$0xff]
        %v615 = vld [vmem:[%s377 + $0x688] sm:$0xff]
        %v616 = vld [vmem:[%s377 + $0x690] sm:$0xff]
        %v617 = vld [vmem:[%s377 + $0x698] sm:$0xff]
        %v618 = vld [vmem:[%s377 + $0x6a0] sm:$0xff]
        %v619 = vld [vmem:[%s377 + $0x6a8] sm:$0xff]
        %v620 = vld [vmem:[%s377 + $0x6b0] sm:$0xff]
        %v621 = vld [vmem:[%s377 + $0x6b8] sm:$0xff]
        %v622 = vld [vmem:[%s377 + $0x6c0] sm:$0xff]
        %v623 = vld [vmem:[%s377 + $0x6c8] sm:$0xff]
        %v624 = vld [vmem:[%s377 + $0x6d0] sm:$0xff]
        %v625 = vld [vmem:[%s377 + $0x6d8] sm:$0xff]
        %v626 = vld [vmem:[%s377 + $0x6e0] sm:$0xff]
        %v627 = vld [vmem:[%s377 + $0x6e8] sm:$0xff]
        %v628 = vld [vmem:[%s377 + $0x6f0] sm:$0xff]
        %v629 = vld [vmem:[%s377 + $0x6f8] sm:$0xff]
        %v630 = vld [vmem:[%s377 + $0x700] sm:$0xff]
        %v631 = vld [vmem:[%s377 + $0x708] sm:$0xff]
        %v632 = vld [vmem:[%s377 + $0x710] sm:$0xff]
        %v633 = vld [vmem:[%s377 + $0x718] sm:$0xff]
        %v634 = vld [vmem:[%s377 + $0x720] sm:$0xff]
        %v635 = vld [vmem:[%s377 + $0x728] sm:$0xff]
        %v636 = vld [vmem:[%s377 + $0x730] sm:$0xff]
        %v637 = vld [vmem:[%s377 + $0x738] sm:$0xff]
        %v638 = vld [vmem:[%s377 + $0x740] sm:$0xff]
        %v639 = vld [vmem:[%s377 + $0x748] sm:$0xff]
        %v640 = vld [vmem:[%s377 + $0x750] sm:$0xff]
        %v641 = vld [vmem:[%s377 + $0x758] sm:$0xff]
        %v642 = vld [vmem:[%s377 + $0x760] sm:$0xff]
        %v643 = vld [vmem:[%s377 + $0x768] sm:$0xff]
        %v644 = vld [vmem:[%s377 + $0x770] sm:$0xff]
        %v645 = vld [vmem:[%s377 + $0x778] sm:$0xff]
        %v646 = vld [vmem:[%s377 + $0x780] sm:$0xff]
        %v647 = vld [vmem:[%s377 + $0x788] sm:$0xff]
        %v648 = vld [vmem:[%s377 + $0x790] sm:$0xff]
        %v649 = vld [vmem:[%s377 + $0x798] sm:$0xff]
        %v650 = vld [vmem:[%s377 + $0x7a0] sm:$0xff]
        %v651 = vld [vmem:[%s377 + $0x7a8] sm:$0xff]
        %v652 = vld [vmem:[%s377 + $0x7b0] sm:$0xff]
        %v653 = vld [vmem:[%s377 + $0x7b8] sm:$0xff]
        %v654 = vld [vmem:[%s377 + $0x7c0] sm:$0xff]
        %v655 = vld [vmem:[%s377 + $0x7c8] sm:$0xff]
        %v656 = vld [vmem:[%s377 + $0x7d0] sm:$0xff]
        %v657 = vld [vmem:[%s377 + $0x7d8] sm:$0xff]
        %v658 = vld [vmem:[%s377 + $0x7e0] sm:$0xff]
        %v659 = vld [vmem:[%s377 + $0x7e8] sm:$0xff]
        %v660 = vld [vmem:[%s377 + $0x7f0] sm:$0xff]
        %v661 = vld [vmem:[%s377 + $0x7f8] sm:$0xff]
        %s662 = smul.u32 %s20, 256
        %s663 = ssub.s32 1000, %s662
        %v664 = vlaneseq
        %v665 = vshrl.u32 %v664, 7
        %v666 = vadd.s32 %v665, 8
        %v667 = vadd.s32 %v665, 16
        %v668 = vadd.s32 %v665, 24
        %v669 = vadd.s32 %v665, 32
        %v670 = vadd.s32 %v665, 40
        %v671 = vadd.s32 %v665, 48
        %v672 = vadd.s32 %v665, 56
        %v673 = vadd.s32 %v665, 64
        %v674 = vadd.s32 %v665, 72
        %v675 = vadd.s32 %v665, 80
        %v676 = vadd.s32 %v665, 88
        %v677 = vadd.s32 %v665, 96
        %v678 = vadd.s32 %v665, 104
        %v679 = vadd.s32 %v665, 112
        %v680 = vadd.s32 %v665, 120
        %v681 = vadd.s32 %v665, 128
        %v682 = vadd.s32 %v665, 136
        %v683 = vadd.s32 %v665, 144
        %v684 = vadd.s32 %v665, 152
        %v685 = vadd.s32 %v665, 160
        %v686 = vadd.s32 %v665, 168
        %v687 = vadd.s32 %v665, 176
        %v688 = vadd.s32 %v665, 184
        %v689 = vadd.s32 %v665, 192
        %v690 = vadd.s32 %v665, 200
        %v691 = vadd.s32 %v665, 208
        %v692 = vadd.s32 %v665, 216
        %v693 = vadd.s32 %v665, 224
        %v694 = vadd.s32 %v665, 232
        %v695 = vadd.s32 %v665, 240
        %v696 = vadd.s32 %v665, 248
        %v697 = vstv %s663
        %vm698 = vcmp.lt.s32.totalorder %v665, %v697
        %vm699 = vcmp.lt.s32.totalorder %v666, %v697
        %vm700 = vcmp.lt.s32.totalorder %v667, %v697
        %vm701 = vcmp.lt.s32.totalorder %v668, %v697
        %vm702 = vcmp.lt.s32.totalorder %v669, %v697
        %vm703 = vcmp.lt.s32.totalorder %v670, %v697
        %vm704 = vcmp.lt.s32.totalorder %v671, %v697
        %vm705 = vcmp.lt.s32.totalorder %v672, %v697
        %vm706 = vcmp.lt.s32.totalorder %v673, %v697
        %vm707 = vcmp.lt.s32.totalorder %v674, %v697
        %vm708 = vcmp.lt.s32.totalorder %v675, %v697
        %vm709 = vcmp.lt.s32.totalorder %v676, %v697
        %vm710 = vcmp.lt.s32.totalorder %v677, %v697
        %vm711 = vcmp.lt.s32.totalorder %v678, %v697
        %vm712 = vcmp.lt.s32.totalorder %v679, %v697
        %vm713 = vcmp.lt.s32.totalorder %v680, %v697
        %vm714 = vcmp.lt.s32.totalorder %v681, %v697
        %vm715 = vcmp.lt.s32.totalorder %v682, %v697
        %vm716 = vcmp.lt.s32.totalorder %v683, %v697
        %vm717 = vcmp.lt.s32.totalorder %v684, %v697
        %vm718 = vcmp.lt.s32.totalorder %v685, %v697
        %vm719 = vcmp.lt.s32.totalorder %v686, %v697
        %vm720 = vcmp.lt.s32.totalorder %v687, %v697
        %vm721 = vcmp.lt.s32.totalorder %v688, %v697
        %vm722 = vcmp.lt.s32.totalorder %v689, %v697
        %vm723 = vcmp.lt.s32.totalorder %v690, %v697
        %vm724 = vcmp.lt.s32.totalorder %v691, %v697
        %vm725 = vcmp.lt.s32.totalorder %v692, %v697
        %vm726 = vcmp.lt.s32.totalorder %v693, %v697
        %vm727 = vcmp.lt.s32.totalorder %v694, %v697
        %vm728 = vcmp.lt.s32.totalorder %v695, %v697
        %vm729 = vcmp.lt.s32.totalorder %v696, %v697
        %v730 = vsel %vm698, 1, 0
        %v731 = vsel %vm699, 1, 0
        %v732 = vsel %vm700, 1, 0
        %v733 = vsel %vm701, 1, 0
        %v734 = vsel %vm702, 1, 0
        %v735 = vsel %vm703, 1, 0
        %v736 = vsel %vm704, 1, 0
        %v737 = vsel %vm705, 1, 0
        %v738 = vsel %vm706, 1, 0
        %v739 = vsel %vm707, 1, 0
        %v740 = vsel %vm708, 1, 0
        %v741 = vsel %vm709, 1, 0
        %v742 = vsel %vm710, 1, 0
        %v743 = vsel %vm711, 1, 0
        %v744 = vsel %vm712, 1, 0
        %v745 = vsel %vm713, 1, 0
        %v746 = vsel %vm714, 1, 0
        %v747 = vsel %vm715, 1, 0
        %v748 = vsel %vm716, 1, 0
        %v749 = vsel %vm717, 1, 0
        %v750 = vsel %vm718, 1, 0
        %v751 = vsel %vm719, 1, 0
        %v752 = vsel %vm720, 1, 0
        %v753 = vsel %vm721, 1, 0
        %v754 = vsel %vm722, 1, 0
        %v755 = vsel %vm723, 1, 0
        %v756 = vsel %vm724, 1, 0
        %v757 = vsel %vm725, 1, 0
        %v758 = vsel %vm726, 1, 0
        %v759 = vsel %vm727, 1, 0
        %v760 = vsel %vm728, 1, 0
        %v761 = vsel %vm729, 1, 0
        %vm762 = vcmp.eq.s32.totalorder %v730, 1
        %vm763 = vcmp.eq.s32.totalorder %v731, 1
        %vm764 = vcmp.eq.s32.totalorder %v732, 1
        %vm765 = vcmp.eq.s32.totalorder %v733, 1
        %vm766 = vcmp.eq.s32.totalorder %v734, 1
        %vm767 = vcmp.eq.s32.totalorder %v735, 1
        %vm768 = vcmp.eq.s32.totalorder %v736, 1
        %vm769 = vcmp.eq.s32.totalorder %v737, 1
        %vm770 = vcmp.eq.s32.totalorder %v738, 1
        %vm771 = vcmp.eq.s32.totalorder %v739, 1
        %vm772 = vcmp.eq.s32.totalorder %v740, 1
        %vm773 = vcmp.eq.s32.totalorder %v741, 1
        %vm774 = vcmp.eq.s32.totalorder %v742, 1
        %vm775 = vcmp.eq.s32.totalorder %v743, 1
        %vm776 = vcmp.eq.s32.totalorder %v744, 1
        %vm777 = vcmp.eq.s32.totalorder %v745, 1
        %vm778 = vcmp.eq.s32.totalorder %v746, 1
        %vm779 = vcmp.eq.s32.totalorder %v747, 1
        %vm780 = vcmp.eq.s32.totalorder %v748, 1
        %vm781 = vcmp.eq.s32.totalorder %v749, 1
        %vm782 = vcmp.eq.s32.totalorder %v750, 1
        %vm783 = vcmp.eq.s32.totalorder %v751, 1
        %vm784 = vcmp.eq.s32.totalorder %v752, 1
        %vm785 = vcmp.eq.s32.totalorder %v753, 1
        %vm786 = vcmp.eq.s32.totalorder %v754, 1
        %vm787 = vcmp.eq.s32.totalorder %v755, 1
        %vm788 = vcmp.eq.s32.totalorder %v756, 1
        %vm789 = vcmp.eq.s32.totalorder %v757, 1
        %vm790 = vcmp.eq.s32.totalorder %v758, 1
        %vm791 = vcmp.eq.s32.totalorder %v759, 1
        %vm792 = vcmp.eq.s32.totalorder %v760, 1
        %vm793 = vcmp.eq.s32.totalorder %v761, 1
        %v794 = vsel %vm762, %v406, 0.0
        %v795 = vsel %vm763, %v407, 0.0
        %v796 = vsel %vm764, %v408, 0.0
        %v797 = vsel %vm765, %v409, 0.0
        %v798 = vsel %vm766, %v410, 0.0
        %v799 = vsel %vm767, %v411, 0.0
        %v800 = vsel %vm768, %v412, 0.0
        %v801 = vsel %vm769, %v413, 0.0
        %v802 = vsel %vm770, %v414, 0.0
        %v803 = vsel %vm771, %v415, 0.0
        %v804 = vsel %vm772, %v416, 0.0
        %v805 = vsel %vm773, %v417, 0.0
        %v806 = vsel %vm774, %v418, 0.0
        %v807 = vsel %vm775, %v419, 0.0
        %v808 = vsel %vm776, %v420, 0.0
        %v809 = vsel %vm777, %v421, 0.0
        %v810 = vsel %vm778, %v422, 0.0
        %v811 = vsel %vm779, %v423, 0.0
        %v812 = vsel %vm780, %v424, 0.0
        %v813 = vsel %vm781, %v425, 0.0
        %v814 = vsel %vm782, %v426, 0.0
        %v815 = vsel %vm783, %v427, 0.0
        %v816 = vsel %vm784, %v428, 0.0
        %v817 = vsel %vm785, %v429, 0.0
        %v818 = vsel %vm786, %v430, 0.0
        %v819 = vsel %vm787, %v431, 0.0
        %v820 = vsel %vm788, %v432, 0.0
        %v821 = vsel %vm789, %v433, 0.0
        %v822 = vsel %vm790, %v434, 0.0
        %v823 = vsel %vm791, %v435, 0.0
        %v824 = vsel %vm792, %v436, 0.0
        %v825 = vsel %vm793, %v437, 0.0
        %v826 = vsel %vm762, %v438, 0.0
        %v827 = vsel %vm763, %v439, 0.0
        %v828 = vsel %vm764, %v440, 0.0
        %v829 = vsel %vm765, %v441, 0.0
        %v830 = vsel %vm766, %v442, 0.0
        %v831 = vsel %vm767, %v443, 0.0
        %v832 = vsel %vm768, %v444, 0.0
        %v833 = vsel %vm769, %v445, 0.0
        %v834 = vsel %vm770, %v446, 0.0
        %v835 = vsel %vm771, %v447, 0.0
        %v836 = vsel %vm772, %v448, 0.0
        %v837 = vsel %vm773, %v449, 0.0
        %v838 = vsel %vm774, %v450, 0.0
        %v839 = vsel %vm775, %v451, 0.0
        %v840 = vsel %vm776, %v452, 0.0
        %v841 = vsel %vm777, %v453, 0.0
        %v842 = vsel %vm778, %v454, 0.0
        %v843 = vsel %vm779, %v455, 0.0
        %v844 = vsel %vm780, %v456, 0.0
        %v845 = vsel %vm781, %v457, 0.0
        %v846 = vsel %vm782, %v458, 0.0
        %v847 = vsel %vm783, %v459, 0.0
        %v848 = vsel %vm784, %v460, 0.0
        %v849 = vsel %vm785, %v461, 0.0
        %v850 = vsel %vm786, %v462, 0.0
        %v851 = vsel %vm787, %v463, 0.0
        %v852 = vsel %vm788, %v464, 0.0
        %v853 = vsel %vm789, %v465, 0.0
        %v854 = vsel %vm790, %v466, 0.0
        %v855 = vsel %vm791, %v467, 0.0
        %v856 = vsel %vm792, %v468, 0.0
        %v857 = vsel %vm793, %v469, 0.0
        %v858 = vsel %vm762, %v470, 0.0
        %v859 = vsel %vm763, %v471, 0.0
        %v860 = vsel %vm764, %v472, 0.0
        %v861 = vsel %vm765, %v473, 0.0
        %v862 = vsel %vm766, %v474, 0.0
        %v863 = vsel %vm767, %v475, 0.0
        %v864 = vsel %vm768, %v476, 0.0
        %v865 = vsel %vm769, %v477, 0.0
        %v866 = vsel %vm770, %v478, 0.0
        %v867 = vsel %vm771, %v479, 0.0
        %v868 = vsel %vm772, %v480, 0.0
        %v869 = vsel %vm773, %v481, 0.0
        %v870 = vsel %vm774, %v482, 0.0
        %v871 = vsel %vm775, %v483, 0.0
        %v872 = vsel %vm776, %v484, 0.0
        %v873 = vsel %vm777, %v485, 0.0
        %v874 = vsel %vm778, %v486, 0.0
        %v875 = vsel %vm779, %v487, 0.0
        %v876 = vsel %vm780, %v488, 0.0
        %v877 = vsel %vm781, %v489, 0.0
        %v878 = vsel %vm782, %v490, 0.0
        %v879 = vsel %vm783, %v491, 0.0
        %v880 = vsel %vm784, %v492, 0.0
        %v881 = vsel %vm785, %v493, 0.0
        %v882 = vsel %vm786, %v494, 0.0
        %v883 = vsel %vm787, %v495, 0.0
        %v884 = vsel %vm788, %v496, 0.0
        %v885 = vsel %vm789, %v497, 0.0
        %v886 = vsel %vm790, %v498, 0.0
        %v887 = vsel %vm791, %v499, 0.0
        %v888 = vsel %vm792, %v500, 0.0
        %v889 = vsel %vm793, %v501, 0.0
        %v890 = vsel %vm762, %v502, 0.0
        %v891 = vsel %vm763, %v503, 0.0
        %v892 = vsel %vm764, %v504, 0.0
        %v893 = vsel %vm765, %v505, 0.0
        %v894 = vsel %vm766, %v506, 0.0
        %v895 = vsel %vm767, %v507, 0.0
        %v896 = vsel %vm768, %v508, 0.0
        %v897 = vsel %vm769, %v509, 0.0
        %v898 = vsel %vm770, %v510, 0.0
        %v899 = vsel %vm771, %v511, 0.0
        %v900 = vsel %vm772, %v512, 0.0
        %v901 = vsel %vm773, %v513, 0.0
        %v902 = vsel %vm774, %v514, 0.0
        %v903 = vsel %vm775, %v515, 0.0
        %v904 = vsel %vm776, %v516, 0.0
        %v905 = vsel %vm777, %v517, 0.0
        %v906 = vsel %vm778, %v518, 0.0
        %v907 = vsel %vm779, %v519, 0.0
        %v908 = vsel %vm780, %v520, 0.0
        %v909 = vsel %vm781, %v521, 0.0
        %v910 = vsel %vm782, %v522, 0.0
        %v911 = vsel %vm783, %v523, 0.0
        %v912 = vsel %vm784, %v524, 0.0
        %v913 = vsel %vm785, %v525, 0.0
        %v914 = vsel %vm786, %v526, 0.0
        %v915 = vsel %vm787, %v527, 0.0
        %v916 = vsel %vm788, %v528, 0.0
        %v917 = vsel %vm789, %v529, 0.0
        %v918 = vsel %vm790, %v530, 0.0
        %v919 = vsel %vm791, %v531, 0.0
        %v920 = vsel %vm792, %v532, 0.0
        %v921 = vsel %vm793, %v533, 0.0
        %v922 = vsel %vm762, %v534, 0.0
        %v923 = vsel %vm763, %v535, 0.0
        %v924 = vsel %vm764, %v536, 0.0
        %v925 = vsel %vm765, %v537, 0.0
        %v926 = vsel %vm766, %v538, 0.0
        %v927 = vsel %vm767, %v539, 0.0
        %v928 = vsel %vm768, %v540, 0.0
        %v929 = vsel %vm769, %v541, 0.0
        %v930 = vsel %vm770, %v542, 0.0
        %v931 = vsel %vm771, %v543, 0.0
        %v932 = vsel %vm772, %v544, 0.0
        %v933 = vsel %vm773, %v545, 0.0
        %v934 = vsel %vm774, %v546, 0.0
        %v935 = vsel %vm775, %v547, 0.0
        %v936 = vsel %vm776, %v548, 0.0
        %v937 = vsel %vm777, %v549, 0.0
        %v938 = vsel %vm778, %v550, 0.0
        %v939 = vsel %vm779, %v551, 0.0
        %v940 = vsel %vm780, %v552, 0.0
        %v941 = vsel %vm781, %v553, 0.0
        %v942 = vsel %vm782, %v554, 0.0
        %v943 = vsel %vm783, %v555, 0.0
        %v944 = vsel %vm784, %v556, 0.0
        %v945 = vsel %vm785, %v557, 0.0
        %v946 = vsel %vm786, %v558, 0.0
        %v947 = vsel %vm787, %v559, 0.0
        %v948 = vsel %vm788, %v560, 0.0
        %v949 = vsel %vm789, %v561, 0.0
        %v950 = vsel %vm790, %v562, 0.0
        %v951 = vsel %vm791, %v563, 0.0
        %v952 = vsel %vm792, %v564, 0.0
        %v953 = vsel %vm793, %v565, 0.0
        %v954 = vsel %vm762, %v566, 0.0
        %v955 = vsel %vm763, %v567, 0.0
        %v956 = vsel %vm764, %v568, 0.0
        %v957 = vsel %vm765, %v569, 0.0
        %v958 = vsel %vm766, %v570, 0.0
        %v959 = vsel %vm767, %v571, 0.0
        %v960 = vsel %vm768, %v572, 0.0
        %v961 = vsel %vm769, %v573, 0.0
        %v962 = vsel %vm770, %v574, 0.0
        %v963 = vsel %vm771, %v575, 0.0
        %v964 = vsel %vm772, %v576, 0.0
        %v965 = vsel %vm773, %v577, 0.0
        %v966 = vsel %vm774, %v578, 0.0
        %v967 = vsel %vm775, %v579, 0.0
        %v968 = vsel %vm776, %v580, 0.0
        %v969 = vsel %vm777, %v581, 0.0
        %v970 = vsel %vm778, %v582, 0.0
        %v971 = vsel %vm779, %v583, 0.0
        %v972 = vsel %vm780, %v584, 0.0
        %v973 = vsel %vm781, %v585, 0.0
        %v974 = vsel %vm782, %v586, 0.0
        %v975 = vsel %vm783, %v587, 0.0
        %v976 = vsel %vm784, %v588, 0.0
        %v977 = vsel %vm785, %v589, 0.0
        %v978 = vsel %vm786, %v590, 0.0
        %v979 = vsel %vm787, %v591, 0.0
        %v980 = vsel %vm788, %v592, 0.0
        %v981 = vsel %vm789, %v593, 0.0
        %v982 = vsel %vm790, %v594, 0.0
        %v983 = vsel %vm791, %v595, 0.0
        %v984 = vsel %vm792, %v596, 0.0
        %v985 = vsel %vm793, %v597, 0.0
        %v986 = vsel %vm762, %v598, 0.0
        %v987 = vsel %vm763, %v599, 0.0
        %v988 = vsel %vm764, %v600, 0.0
        %v989 = vsel %vm765, %v601, 0.0
        %v990 = vsel %vm766, %v602, 0.0
        %v991 = vsel %vm767, %v603, 0.0
        %v992 = vsel %vm768, %v604, 0.0
        %v993 = vsel %vm769, %v605, 0.0
        %v994 = vsel %vm770, %v606, 0.0
        %v995 = vsel %vm771, %v607, 0.0
        %v996 = vsel %vm772, %v608, 0.0
        %v997 = vsel %vm773, %v609, 0.0
        %v998 = vsel %vm774, %v610, 0.0
        %v999 = vsel %vm775, %v611, 0.0
        %v1000 = vsel %vm776, %v612, 0.0
        %v1001 = vsel %vm777, %v613, 0.0
        %v1002 = vsel %vm778, %v614, 0.0
        %v1003 = vsel %vm779, %v615, 0.0
        %v1004 = vsel %vm780, %v616, 0.0
        %v1005 = vsel %vm781, %v617, 0.0
        %v1006 = vsel %vm782, %v618, 0.0
        %v1007 = vsel %vm783, %v619, 0.0
        %v1008 = vsel %vm784, %v620, 0.0
        %v1009 = vsel %vm785, %v621, 0.0
        %v1010 = vsel %vm786, %v622, 0.0
        %v1011 = vsel %vm787, %v623, 0.0
        %v1012 = vsel %vm788, %v624, 0.0
        %v1013 = vsel %vm789, %v625, 0.0
        %v1014 = vsel %vm790, %v626, 0.0
        %v1015 = vsel %vm791, %v627, 0.0
        %v1016 = vsel %vm792, %v628, 0.0
        %v1017 = vsel %vm793, %v629, 0.0
        %v1018 = vsel %vm762, %v630, 0.0
        %v1019 = vsel %vm763, %v631, 0.0
        %v1020 = vsel %vm764, %v632, 0.0
        %v1021 = vsel %vm765, %v633, 0.0
        %v1022 = vsel %vm766, %v634, 0.0
        %v1023 = vsel %vm767, %v635, 0.0
        %v1024 = vsel %vm768, %v636, 0.0
        %v1025 = vsel %vm769, %v637, 0.0
        %v1026 = vsel %vm770, %v638, 0.0
        %v1027 = vsel %vm771, %v639, 0.0
        %v1028 = vsel %vm772, %v640, 0.0
        %v1029 = vsel %vm773, %v641, 0.0
        %v1030 = vsel %vm774, %v642, 0.0
        %v1031 = vsel %vm775, %v643, 0.0
        %v1032 = vsel %vm776, %v644, 0.0
        %v1033 = vsel %vm777, %v645, 0.0
        %v1034 = vsel %vm778, %v646, 0.0
        %v1035 = vsel %vm779, %v647, 0.0
        %v1036 = vsel %vm780, %v648, 0.0
        %v1037 = vsel %vm781, %v649, 0.0
        %v1038 = vsel %vm782, %v650, 0.0
        %v1039 = vsel %vm783, %v651, 0.0
        %v1040 = vsel %vm784, %v652, 0.0
        %v1041 = vsel %vm785, %v653, 0.0
        %v1042 = vsel %vm786, %v654, 0.0
        %v1043 = vsel %vm787, %v655, 0.0
        %v1044 = vsel %vm788, %v656, 0.0
        %v1045 = vsel %vm789, %v657, 0.0
        %v1046 = vsel %vm790, %v658, 0.0
        %v1047 = vsel %vm791, %v659, 0.0
        %v1048 = vsel %vm792, %v660, 0.0
        %v1049 = vsel %vm793, %v661, 0.0
        %v1050 = vld [vmem:[#allocation2] sm:$0xff]
        %vm1051 = vcmask 261120
        %v1052 = vsel %vm1051, %v794, 0.0
        %v1053 = vsel %vm1051, %v795, 0.0
        %v1054 = vadd.f32 %v1052, %v1053
        %v1055 = vsel %vm1051, %v796, 0.0
        %v1056 = vadd.f32 %v1054, %v1055
        %v1057 = vsel %vm1051, %v797, 0.0
        %v1058 = vadd.f32 %v1056, %v1057
        %v1059 = vsel %vm1051, %v798, 0.0
        %v1060 = vadd.f32 %v1058, %v1059
        %v1061 = vsel %vm1051, %v799, 0.0
        %v1062 = vadd.f32 %v1060, %v1061
        %v1063 = vsel %vm1051, %v800, 0.0
        %v1064 = vadd.f32 %v1062, %v1063
        %v1065 = vsel %vm1051, %v801, 0.0
        %v1066 = vadd.f32 %v1064, %v1065
        %v1067 = vsel %vm1051, %v802, 0.0
        %v1068 = vadd.f32 %v1066, %v1067
        %v1069 = vsel %vm1051, %v803, 0.0
        %v1070 = vadd.f32 %v1068, %v1069
        %v1071 = vsel %vm1051, %v804, 0.0
        %v1072 = vadd.f32 %v1070, %v1071
        %v1073 = vsel %vm1051, %v805, 0.0
        %v1074 = vadd.f32 %v1072, %v1073
        %v1075 = vsel %vm1051, %v806, 0.0
        %v1076 = vadd.f32 %v1074, %v1075
        %v1077 = vsel %vm1051, %v807, 0.0
        %v1078 = vadd.f32 %v1076, %v1077
        %v1079 = vsel %vm1051, %v808, 0.0
        %v1080 = vadd.f32 %v1078, %v1079
        %v1081 = vsel %vm1051, %v809, 0.0
        %v1082 = vadd.f32 %v1080, %v1081
        %v1083 = vsel %vm1051, %v810, 0.0
        %v1084 = vadd.f32 %v1082, %v1083
        %v1085 = vsel %vm1051, %v811, 0.0
        %v1086 = vadd.f32 %v1084, %v1085
        %v1087 = vsel %vm1051, %v812, 0.0
        %v1088 = vadd.f32 %v1086, %v1087
        %v1089 = vsel %vm1051, %v813, 0.0
        %v1090 = vadd.f32 %v1088, %v1089
        %v1091 = vsel %vm1051, %v814, 0.0
        %v1092 = vadd.f32 %v1090, %v1091
        %v1093 = vsel %vm1051, %v815, 0.0
        %v1094 = vadd.f32 %v1092, %v1093
        %v1095 = vsel %vm1051, %v816, 0.0
        %v1096 = vadd.f32 %v1094, %v1095
        %v1097 = vsel %vm1051, %v817, 0.0
        %v1098 = vadd.f32 %v1096, %v1097
        %v1099 = vsel %vm1051, %v818, 0.0
        %v1100 = vadd.f32 %v1098, %v1099
        %v1101 = vsel %vm1051, %v819, 0.0
        %v1102 = vadd.f32 %v1100, %v1101
        %v1103 = vsel %vm1051, %v820, 0.0
        %v1104 = vadd.f32 %v1102, %v1103
        %v1105 = vsel %vm1051, %v821, 0.0
        %v1106 = vadd.f32 %v1104, %v1105
        %v1107 = vsel %vm1051, %v822, 0.0
        %v1108 = vadd.f32 %v1106, %v1107
        %v1109 = vsel %vm1051, %v823, 0.0
        %v1110 = vadd.f32 %v1108, %v1109
        %v1111 = vsel %vm1051, %v824, 0.0
        %v1112 = vadd.f32 %v1110, %v1111
        %v1113 = vsel %vm1051, %v825, 0.0
        %v1114 = vadd.f32 %v1112, %v1113
        %v1115 = vrot.slane %v1114, 4
        %v1116 = vadd.f32 %v1114, %v1115
        %v1117 = vrot.slane %v1116, 2
        %v1118 = vadd.f32 %v1116, %v1117
        %v1119 = vrot.slane %v1118, 1
        %v1120 = vadd.f32 %v1118, %v1119
        %v1121 = vsel %vm1051, %v826, 0.0
        %v1122 = vsel %vm1051, %v827, 0.0
        %v1123 = vadd.f32 %v1121, %v1122
        %v1124 = vsel %vm1051, %v828, 0.0
        %v1125 = vadd.f32 %v1123, %v1124
        %v1126 = vsel %vm1051, %v829, 0.0
        %v1127 = vadd.f32 %v1125, %v1126
        %v1128 = vsel %vm1051, %v830, 0.0
        %v1129 = vadd.f32 %v1127, %v1128
        %v1130 = vsel %vm1051, %v831, 0.0
        %v1131 = vadd.f32 %v1129, %v1130
        %v1132 = vsel %vm1051, %v832, 0.0
        %v1133 = vadd.f32 %v1131, %v1132
        %v1134 = vsel %vm1051, %v833, 0.0
        %v1135 = vadd.f32 %v1133, %v1134
        %v1136 = vsel %vm1051, %v834, 0.0
        %v1137 = vadd.f32 %v1135, %v1136
        %v1138 = vsel %vm1051, %v835, 0.0
        %v1139 = vadd.f32 %v1137, %v1138
        %v1140 = vsel %vm1051, %v836, 0.0
        %v1141 = vadd.f32 %v1139, %v1140
        %v1142 = vsel %vm1051, %v837, 0.0
        %v1143 = vadd.f32 %v1141, %v1142
        %v1144 = vsel %vm1051, %v838, 0.0
        %v1145 = vadd.f32 %v1143, %v1144
        %v1146 = vsel %vm1051, %v839, 0.0
        %v1147 = vadd.f32 %v1145, %v1146
        %v1148 = vsel %vm1051, %v840, 0.0
        %v1149 = vadd.f32 %v1147, %v1148
        %v1150 = vsel %vm1051, %v841, 0.0
        %v1151 = vadd.f32 %v1149, %v1150
        %v1152 = vsel %vm1051, %v842, 0.0
        %v1153 = vadd.f32 %v1151, %v1152
        %v1154 = vsel %vm1051, %v843, 0.0
        %v1155 = vadd.f32 %v1153, %v1154
        %v1156 = vsel %vm1051, %v844, 0.0
        %v1157 = vadd.f32 %v1155, %v1156
        %v1158 = vsel %vm1051, %v845, 0.0
        %v1159 = vadd.f32 %v1157, %v1158
        %v1160 = vsel %vm1051, %v846, 0.0
        %v1161 = vadd.f32 %v1159, %v1160
        %v1162 = vsel %vm1051, %v847, 0.0
        %v1163 = vadd.f32 %v1161, %v1162
        %v1164 = vsel %vm1051, %v848, 0.0
        %v1165 = vadd.f32 %v1163, %v1164
        %v1166 = vsel %vm1051, %v849, 0.0
        %v1167 = vadd.f32 %v1165, %v1166
        %v1168 = vsel %vm1051, %v850, 0.0
        %v1169 = vadd.f32 %v1167, %v1168
        %v1170 = vsel %vm1051, %v851, 0.0
        %v1171 = vadd.f32 %v1169, %v1170
        %v1172 = vsel %vm1051, %v852, 0.0
        %v1173 = vadd.f32 %v1171, %v1172
        %v1174 = vsel %vm1051, %v853, 0.0
        %v1175 = vadd.f32 %v1173, %v1174
        %v1176 = vsel %vm1051, %v854, 0.0
        %v1177 = vadd.f32 %v1175, %v1176
        %v1178 = vsel %vm1051, %v855, 0.0
        %v1179 = vadd.f32 %v1177, %v1178
        %v1180 = vsel %vm1051, %v856, 0.0
        %v1181 = vadd.f32 %v1179, %v1180
        %v1182 = vsel %vm1051, %v857, 0.0
        %v1183 = vadd.f32 %v1181, %v1182
        %v1184 = vrot.slane %v1183, 4
        %v1185 = vadd.f32 %v1183, %v1184
        %v1186 = vrot.slane %v1185, 2
        %v1187 = vadd.f32 %v1185, %v1186
        %v1188 = vrot.slane %v1187, 1
        %v1189 = vadd.f32 %v1187, %v1188
        %v1190 = vsel %vm1051, %v858, 0.0
        %v1191 = vsel %vm1051, %v859, 0.0
        %v1192 = vadd.f32 %v1190, %v1191
        %v1193 = vsel %vm1051, %v860, 0.0
        %v1194 = vadd.f32 %v1192, %v1193
        %v1195 = vsel %vm1051, %v861, 0.0
        %v1196 = vadd.f32 %v1194, %v1195
        %v1197 = vsel %vm1051, %v862, 0.0
        %v1198 = vadd.f32 %v1196, %v1197
        %v1199 = vsel %vm1051, %v863, 0.0
        %v1200 = vadd.f32 %v1198, %v1199
        %v1201 = vsel %vm1051, %v864, 0.0
        %v1202 = vadd.f32 %v1200, %v1201
        %v1203 = vsel %vm1051, %v865, 0.0
        %v1204 = vadd.f32 %v1202, %v1203
        %v1205 = vsel %vm1051, %v866, 0.0
        %v1206 = vadd.f32 %v1204, %v1205
        %v1207 = vsel %vm1051, %v867, 0.0
        %v1208 = vadd.f32 %v1206, %v1207
        %v1209 = vsel %vm1051, %v868, 0.0
        %v1210 = vadd.f32 %v1208, %v1209
        %v1211 = vsel %vm1051, %v869, 0.0
        %v1212 = vadd.f32 %v1210, %v1211
        %v1213 = vsel %vm1051, %v870, 0.0
        %v1214 = vadd.f32 %v1212, %v1213
        %v1215 = vsel %vm1051, %v871, 0.0
        %v1216 = vadd.f32 %v1214, %v1215
        %v1217 = vsel %vm1051, %v872, 0.0
        %v1218 = vadd.f32 %v1216, %v1217
        %v1219 = vsel %vm1051, %v873, 0.0
        %v1220 = vadd.f32 %v1218, %v1219
        %v1221 = vsel %vm1051, %v874, 0.0
        %v1222 = vadd.f32 %v1220, %v1221
        %v1223 = vsel %vm1051, %v875, 0.0
        %v1224 = vadd.f32 %v1222, %v1223
        %v1225 = vsel %vm1051, %v876, 0.0
        %v1226 = vadd.f32 %v1224, %v1225
        %v1227 = vsel %vm1051, %v877, 0.0
        %v1228 = vadd.f32 %v1226, %v1227
        %v1229 = vsel %vm1051, %v878, 0.0
        %v1230 = vadd.f32 %v1228, %v1229
        %v1231 = vsel %vm1051, %v879, 0.0
        %v1232 = vadd.f32 %v1230, %v1231
        %v1233 = vsel %vm1051, %v880, 0.0
        %v1234 = vadd.f32 %v1232, %v1233
        %v1235 = vsel %vm1051, %v881, 0.0
        %v1236 = vadd.f32 %v1234, %v1235
        %v1237 = vsel %vm1051, %v882, 0.0
        %v1238 = vadd.f32 %v1236, %v1237
        %v1239 = vsel %vm1051, %v883, 0.0
        %v1240 = vadd.f32 %v1238, %v1239
        %v1241 = vsel %vm1051, %v884, 0.0
        %v1242 = vadd.f32 %v1240, %v1241
        %v1243 = vsel %vm1051, %v885, 0.0
        %v1244 = vadd.f32 %v1242, %v1243
        %v1245 = vsel %vm1051, %v886, 0.0
        %v1246 = vadd.f32 %v1244, %v1245
        %v1247 = vsel %vm1051, %v887, 0.0
        %v1248 = vadd.f32 %v1246, %v1247
        %v1249 = vsel %vm1051, %v888, 0.0
        %v1250 = vadd.f32 %v1248, %v1249
        %v1251 = vsel %vm1051, %v889, 0.0
        %v1252 = vadd.f32 %v1250, %v1251
        %v1253 = vrot.slane %v1252, 4
        %v1254 = vadd.f32 %v1252, %v1253
        %v1255 = vrot.slane %v1254, 2
        %v1256 = vadd.f32 %v1254, %v1255
        %v1257 = vrot.slane %v1256, 1
        %v1258 = vadd.f32 %v1256, %v1257
        %v1259 = vsel %vm1051, %v890, 0.0
        %v1260 = vsel %vm1051, %v891, 0.0
        %v1261 = vadd.f32 %v1259, %v1260
        %v1262 = vsel %vm1051, %v892, 0.0
        %v1263 = vadd.f32 %v1261, %v1262
        %v1264 = vsel %vm1051, %v893, 0.0
        %v1265 = vadd.f32 %v1263, %v1264
        %v1266 = vsel %vm1051, %v894, 0.0
        %v1267 = vadd.f32 %v1265, %v1266
        %v1268 = vsel %vm1051, %v895, 0.0
        %v1269 = vadd.f32 %v1267, %v1268
        %v1270 = vsel %vm1051, %v896, 0.0
        %v1271 = vadd.f32 %v1269, %v1270
        %v1272 = vsel %vm1051, %v897, 0.0
        %v1273 = vadd.f32 %v1271, %v1272
        %v1274 = vsel %vm1051, %v898, 0.0
        %v1275 = vadd.f32 %v1273, %v1274
        %v1276 = vsel %vm1051, %v899, 0.0
        %v1277 = vadd.f32 %v1275, %v1276
        %v1278 = vsel %vm1051, %v900, 0.0
        %v1279 = vadd.f32 %v1277, %v1278
        %v1280 = vsel %vm1051, %v901, 0.0
        %v1281 = vadd.f32 %v1279, %v1280
        %v1282 = vsel %vm1051, %v902, 0.0
        %v1283 = vadd.f32 %v1281, %v1282
        %v1284 = vsel %vm1051, %v903, 0.0
        %v1285 = vadd.f32 %v1283, %v1284
        %v1286 = vsel %vm1051, %v904, 0.0
        %v1287 = vadd.f32 %v1285, %v1286
        %v1288 = vsel %vm1051, %v905, 0.0
        %v1289 = vadd.f32 %v1287, %v1288
        %v1290 = vsel %vm1051, %v906, 0.0
        %v1291 = vadd.f32 %v1289, %v1290
        %v1292 = vsel %vm1051, %v907, 0.0
        %v1293 = vadd.f32 %v1291, %v1292
        %v1294 = vsel %vm1051, %v908, 0.0
        %v1295 = vadd.f32 %v1293, %v1294
        %v1296 = vsel %vm1051, %v909, 0.0
        %v1297 = vadd.f32 %v1295, %v1296
        %v1298 = vsel %vm1051, %v910, 0.0
        %v1299 = vadd.f32 %v1297, %v1298
        %v1300 = vsel %vm1051, %v911, 0.0
        %v1301 = vadd.f32 %v1299, %v1300
        %v1302 = vsel %vm1051, %v912, 0.0
        %v1303 = vadd.f32 %v1301, %v1302
        %v1304 = vsel %vm1051, %v913, 0.0
        %v1305 = vadd.f32 %v1303, %v1304
        %v1306 = vsel %vm1051, %v914, 0.0
        %v1307 = vadd.f32 %v1305, %v1306
        %v1308 = vsel %vm1051, %v915, 0.0
        %v1309 = vadd.f32 %v1307, %v1308
        %v1310 = vsel %vm1051, %v916, 0.0
        %v1311 = vadd.f32 %v1309, %v1310
        %v1312 = vsel %vm1051, %v917, 0.0
        %v1313 = vadd.f32 %v1311, %v1312
        %v1314 = vsel %vm1051, %v918, 0.0
        %v1315 = vadd.f32 %v1313, %v1314
        %v1316 = vsel %vm1051, %v919, 0.0
        %v1317 = vadd.f32 %v1315, %v1316
        %v1318 = vsel %vm1051, %v920, 0.0
        %v1319 = vadd.f32 %v1317, %v1318
        %v1320 = vsel %vm1051, %v921, 0.0
        %v1321 = vadd.f32 %v1319, %v1320
        %v1322 = vrot.slane %v1321, 4
        %v1323 = vadd.f32 %v1321, %v1322
        %v1324 = vrot.slane %v1323, 2
        %v1325 = vadd.f32 %v1323, %v1324
        %v1326 = vrot.slane %v1325, 1
        %v1327 = vadd.f32 %v1325, %v1326
        %v1328 = vsel %vm1051, %v922, 0.0
        %v1329 = vsel %vm1051, %v923, 0.0
        %v1330 = vadd.f32 %v1328, %v1329
        %v1331 = vsel %vm1051, %v924, 0.0
        %v1332 = vadd.f32 %v1330, %v1331
        %v1333 = vsel %vm1051, %v925, 0.0
        %v1334 = vadd.f32 %v1332, %v1333
        %v1335 = vsel %vm1051, %v926, 0.0
        %v1336 = vadd.f32 %v1334, %v1335
        %v1337 = vsel %vm1051, %v927, 0.0
        %v1338 = vadd.f32 %v1336, %v1337
        %v1339 = vsel %vm1051, %v928, 0.0
        %v1340 = vadd.f32 %v1338, %v1339
        %v1341 = vsel %vm1051, %v929, 0.0
        %v1342 = vadd.f32 %v1340, %v1341
        %v1343 = vsel %vm1051, %v930, 0.0
        %v1344 = vadd.f32 %v1342, %v1343
        %v1345 = vsel %vm1051, %v931, 0.0
        %v1346 = vadd.f32 %v1344, %v1345
        %v1347 = vsel %vm1051, %v932, 0.0
        %v1348 = vadd.f32 %v1346, %v1347
        %v1349 = vsel %vm1051, %v933, 0.0
        %v1350 = vadd.f32 %v1348, %v1349
        %v1351 = vsel %vm1051, %v934, 0.0
        %v1352 = vadd.f32 %v1350, %v1351
        %v1353 = vsel %vm1051, %v935, 0.0
        %v1354 = vadd.f32 %v1352, %v1353
        %v1355 = vsel %vm1051, %v936, 0.0
        %v1356 = vadd.f32 %v1354, %v1355
        %v1357 = vsel %vm1051, %v937, 0.0
        %v1358 = vadd.f32 %v1356, %v1357
        %v1359 = vsel %vm1051, %v938, 0.0
        %v1360 = vadd.f32 %v1358, %v1359
        %v1361 = vsel %vm1051, %v939, 0.0
        %v1362 = vadd.f32 %v1360, %v1361
        %v1363 = vsel %vm1051, %v940, 0.0
        %v1364 = vadd.f32 %v1362, %v1363
        %v1365 = vsel %vm1051, %v941, 0.0
        %v1366 = vadd.f32 %v1364, %v1365
        %v1367 = vsel %vm1051, %v942, 0.0
        %v1368 = vadd.f32 %v1366, %v1367
        %v1369 = vsel %vm1051, %v943, 0.0
        %v1370 = vadd.f32 %v1368, %v1369
        %v1371 = vsel %vm1051, %v944, 0.0
        %v1372 = vadd.f32 %v1370, %v1371
        %v1373 = vsel %vm1051, %v945, 0.0
        %v1374 = vadd.f32 %v1372, %v1373
        %v1375 = vsel %vm1051, %v946, 0.0
        %v1376 = vadd.f32 %v1374, %v1375
        %v1377 = vsel %vm1051, %v947, 0.0
        %v1378 = vadd.f32 %v1376, %v1377
        %v1379 = vsel %vm1051, %v948, 0.0
        %v1380 = vadd.f32 %v1378, %v1379
        %v1381 = vsel %vm1051, %v949, 0.0
        %v1382 = vadd.f32 %v1380, %v1381
        %v1383 = vsel %vm1051, %v950, 0.0
        %v1384 = vadd.f32 %v1382, %v1383
        %v1385 = vsel %vm1051, %v951, 0.0
        %v1386 = vadd.f32 %v1384, %v1385
        %v1387 = vsel %vm1051, %v952, 0.0
        %v1388 = vadd.f32 %v1386, %v1387
        %v1389 = vsel %vm1051, %v953, 0.0
        %v1390 = vadd.f32 %v1388, %v1389
        %v1391 = vrot.slane %v1390, 4
        %v1392 = vadd.f32 %v1390, %v1391
        %v1393 = vrot.slane %v1392, 2
        %v1394 = vadd.f32 %v1392, %v1393
        %v1395 = vrot.slane %v1394, 1
        %v1396 = vadd.f32 %v1394, %v1395
        %v1397 = vsel %vm1051, %v954, 0.0
        %v1398 = vsel %vm1051, %v955, 0.0
        %v1399 = vadd.f32 %v1397, %v1398
        %v1400 = vsel %vm1051, %v956, 0.0
        %v1401 = vadd.f32 %v1399, %v1400
        %v1402 = vsel %vm1051, %v957, 0.0
        %v1403 = vadd.f32 %v1401, %v1402
        %v1404 = vsel %vm1051, %v958, 0.0
        %v1405 = vadd.f32 %v1403, %v1404
        %v1406 = vsel %vm1051, %v959, 0.0
        %v1407 = vadd.f32 %v1405, %v1406
        %v1408 = vsel %vm1051, %v960, 0.0
        %v1409 = vadd.f32 %v1407, %v1408
        %v1410 = vsel %vm1051, %v961, 0.0
        %v1411 = vadd.f32 %v1409, %v1410
        %v1412 = vsel %vm1051, %v962, 0.0
        %v1413 = vadd.f32 %v1411, %v1412
        %v1414 = vsel %vm1051, %v963, 0.0
        %v1415 = vadd.f32 %v1413, %v1414
        %v1416 = vsel %vm1051, %v964, 0.0
        %v1417 = vadd.f32 %v1415, %v1416
        %v1418 = vsel %vm1051, %v965, 0.0
        %v1419 = vadd.f32 %v1417, %v1418
        %v1420 = vsel %vm1051, %v966, 0.0
        %v1421 = vadd.f32 %v1419, %v1420
        %v1422 = vsel %vm1051, %v967, 0.0
        %v1423 = vadd.f32 %v1421, %v1422
        %v1424 = vsel %vm1051, %v968, 0.0
        %v1425 = vadd.f32 %v1423, %v1424
        %v1426 = vsel %vm1051, %v969, 0.0
        %v1427 = vadd.f32 %v1425, %v1426
        %v1428 = vsel %vm1051, %v970, 0.0
        %v1429 = vadd.f32 %v1427, %v1428
        %v1430 = vsel %vm1051, %v971, 0.0
        %v1431 = vadd.f32 %v1429, %v1430
        %v1432 = vsel %vm1051, %v972, 0.0
        %v1433 = vadd.f32 %v1431, %v1432
        %v1434 = vsel %vm1051, %v973, 0.0
        %v1435 = vadd.f32 %v1433, %v1434
        %v1436 = vsel %vm1051, %v974, 0.0
        %v1437 = vadd.f32 %v1435, %v1436
        %v1438 = vsel %vm1051, %v975, 0.0
        %v1439 = vadd.f32 %v1437, %v1438
        %v1440 = vsel %vm1051, %v976, 0.0
        %v1441 = vadd.f32 %v1439, %v1440
        %v1442 = vsel %vm1051, %v977, 0.0
        %v1443 = vadd.f32 %v1441, %v1442
        %v1444 = vsel %vm1051, %v978, 0.0
        %v1445 = vadd.f32 %v1443, %v1444
        %v1446 = vsel %vm1051, %v979, 0.0
        %v1447 = vadd.f32 %v1445, %v1446
        %v1448 = vsel %vm1051, %v980, 0.0
        %v1449 = vadd.f32 %v1447, %v1448
        %v1450 = vsel %vm1051, %v981, 0.0
        %v1451 = vadd.f32 %v1449, %v1450
        %v1452 = vsel %vm1051, %v982, 0.0
        %v1453 = vadd.f32 %v1451, %v1452
        %v1454 = vsel %vm1051, %v983, 0.0
        %v1455 = vadd.f32 %v1453, %v1454
        %v1456 = vsel %vm1051, %v984, 0.0
        %v1457 = vadd.f32 %v1455, %v1456
        %v1458 = vsel %vm1051, %v985, 0.0
        %v1459 = vadd.f32 %v1457, %v1458
        %v1460 = vrot.slane %v1459, 4
        %v1461 = vadd.f32 %v1459, %v1460
        %v1462 = vrot.slane %v1461, 2
        %v1463 = vadd.f32 %v1461, %v1462
        %v1464 = vrot.slane %v1463, 1
        %v1465 = vadd.f32 %v1463, %v1464
        %v1466 = vsel %vm1051, %v986, 0.0
        %v1467 = vsel %vm1051, %v987, 0.0
        %v1468 = vadd.f32 %v1466, %v1467
        %v1469 = vsel %vm1051, %v988, 0.0
        %v1470 = vadd.f32 %v1468, %v1469
        %v1471 = vsel %vm1051, %v989, 0.0
        %v1472 = vadd.f32 %v1470, %v1471
        %v1473 = vsel %vm1051, %v990, 0.0
        %v1474 = vadd.f32 %v1472, %v1473
        %v1475 = vsel %vm1051, %v991, 0.0
        %v1476 = vadd.f32 %v1474, %v1475
        %v1477 = vsel %vm1051, %v992, 0.0
        %v1478 = vadd.f32 %v1476, %v1477
        %v1479 = vsel %vm1051, %v993, 0.0
        %v1480 = vadd.f32 %v1478, %v1479
        %v1481 = vsel %vm1051, %v994, 0.0
        %v1482 = vadd.f32 %v1480, %v1481
        %v1483 = vsel %vm1051, %v995, 0.0
        %v1484 = vadd.f32 %v1482, %v1483
        %v1485 = vsel %vm1051, %v996, 0.0
        %v1486 = vadd.f32 %v1484, %v1485
        %v1487 = vsel %vm1051, %v997, 0.0
        %v1488 = vadd.f32 %v1486, %v1487
        %v1489 = vsel %vm1051, %v998, 0.0
        %v1490 = vadd.f32 %v1488, %v1489
        %v1491 = vsel %vm1051, %v999, 0.0
        %v1492 = vadd.f32 %v1490, %v1491
        %v1493 = vsel %vm1051, %v1000, 0.0
        %v1494 = vadd.f32 %v1492, %v1493
        %v1495 = vsel %vm1051, %v1001, 0.0
        %v1496 = vadd.f32 %v1494, %v1495
        %v1497 = vsel %vm1051, %v1002, 0.0
        %v1498 = vadd.f32 %v1496, %v1497
        %v1499 = vsel %vm1051, %v1003, 0.0
        %v1500 = vadd.f32 %v1498, %v1499
        %v1501 = vsel %vm1051, %v1004, 0.0
        %v1502 = vadd.f32 %v1500, %v1501
        %v1503 = vsel %vm1051, %v1005, 0.0
        %v1504 = vadd.f32 %v1502, %v1503
        %v1505 = vsel %vm1051, %v1006, 0.0
        %v1506 = vadd.f32 %v1504, %v1505
        %v1507 = vsel %vm1051, %v1007, 0.0
        %v1508 = vadd.f32 %v1506, %v1507
        %v1509 = vsel %vm1051, %v1008, 0.0
        %v1510 = vadd.f32 %v1508, %v1509
        %v1511 = vsel %vm1051, %v1009, 0.0
        %v1512 = vadd.f32 %v1510, %v1511
        %v1513 = vsel %vm1051, %v1010, 0.0
        %v1514 = vadd.f32 %v1512, %v1513
        %v1515 = vsel %vm1051, %v1011, 0.0
        %v1516 = vadd.f32 %v1514, %v1515
        %v1517 = vsel %vm1051, %v1012, 0.0
        %v1518 = vadd.f32 %v1516, %v1517
        %v1519 = vsel %vm1051, %v1013, 0.0
        %v1520 = vadd.f32 %v1518, %v1519
        %v1521 = vsel %vm1051, %v1014, 0.0
        %v1522 = vadd.f32 %v1520, %v1521
        %v1523 = vsel %vm1051, %v1015, 0.0
        %v1524 = vadd.f32 %v1522, %v1523
        %v1525 = vsel %vm1051, %v1016, 0.0
        %v1526 = vadd.f32 %v1524, %v1525
        %v1527 = vsel %vm1051, %v1017, 0.0
        %v1528 = vadd.f32 %v1526, %v1527
        %v1529 = vrot.slane %v1528, 4
        %v1530 = vadd.f32 %v1528, %v1529
        %v1531 = vrot.slane %v1530, 2
        %v1532 = vadd.f32 %v1530, %v1531
        %v1533 = vrot.slane %v1532, 1
        %v1534 = vadd.f32 %v1532, %v1533
        %v1535 = vsel %vm1051, %v1018, 0.0
        %v1536 = vsel %vm1051, %v1019, 0.0
        %v1537 = vadd.f32 %v1535, %v1536
        %v1538 = vsel %vm1051, %v1020, 0.0
        %v1539 = vadd.f32 %v1537, %v1538
        %v1540 = vsel %vm1051, %v1021, 0.0
        %v1541 = vadd.f32 %v1539, %v1540
        %v1542 = vsel %vm1051, %v1022, 0.0
        %v1543 = vadd.f32 %v1541, %v1542
        %v1544 = vsel %vm1051, %v1023, 0.0
        %v1545 = vadd.f32 %v1543, %v1544
        %v1546 = vsel %vm1051, %v1024, 0.0
        %v1547 = vadd.f32 %v1545, %v1546
        %v1548 = vsel %vm1051, %v1025, 0.0
        %v1549 = vadd.f32 %v1547, %v1548
        %v1550 = vsel %vm1051, %v1026, 0.0
        %v1551 = vadd.f32 %v1549, %v1550
        %v1552 = vsel %vm1051, %v1027, 0.0
        %v1553 = vadd.f32 %v1551, %v1552
        %v1554 = vsel %vm1051, %v1028, 0.0
        %v1555 = vadd.f32 %v1553, %v1554
        %v1556 = vsel %vm1051, %v1029, 0.0
        %v1557 = vadd.f32 %v1555, %v1556
        %v1558 = vsel %vm1051, %v1030, 0.0
        %v1559 = vadd.f32 %v1557, %v1558
        %v1560 = vsel %vm1051, %v1031, 0.0
        %v1561 = vadd.f32 %v1559, %v1560
        %v1562 = vsel %vm1051, %v1032, 0.0
        %v1563 = vadd.f32 %v1561, %v1562
        %v1564 = vsel %vm1051, %v1033, 0.0
        %v1565 = vadd.f32 %v1563, %v1564
        %v1566 = vsel %vm1051, %v1034, 0.0
        %v1567 = vadd.f32 %v1565, %v1566
        %v1568 = vsel %vm1051, %v1035, 0.0
        %v1569 = vadd.f32 %v1567, %v1568
        %v1570 = vsel %vm1051, %v1036, 0.0
        %v1571 = vadd.f32 %v1569, %v1570
        %v1572 = vsel %vm1051, %v1037, 0.0
        %v1573 = vadd.f32 %v1571, %v1572
        %v1574 = vsel %vm1051, %v1038, 0.0
        %v1575 = vadd.f32 %v1573, %v1574
        %v1576 = vsel %vm1051, %v1039, 0.0
        %v1577 = vadd.f32 %v1575, %v1576
        %v1578 = vsel %vm1051, %v1040, 0.0
        %v1579 = vadd.f32 %v1577, %v1578
        %v1580 = vsel %vm1051, %v1041, 0.0
        %v1581 = vadd.f32 %v1579, %v1580
        %v1582 = vsel %vm1051, %v1042, 0.0
        %v1583 = vadd.f32 %v1581, %v1582
        %v1584 = vsel %vm1051, %v1043, 0.0
        %v1585 = vadd.f32 %v1583, %v1584
        %v1586 = vsel %vm1051, %v1044, 0.0
        %v1587 = vadd.f32 %v1585, %v1586
        %v1588 = vsel %vm1051, %v1045, 0.0
        %v1589 = vadd.f32 %v1587, %v1588
        %v1590 = vsel %vm1051, %v1046, 0.0
        %v1591 = vadd.f32 %v1589, %v1590
        %v1592 = vsel %vm1051, %v1047, 0.0
        %v1593 = vadd.f32 %v1591, %v1592
        %v1594 = vsel %vm1051, %v1048, 0.0
        %v1595 = vadd.f32 %v1593, %v1594
        %v1596 = vsel %vm1051, %v1049, 0.0
        %v1597 = vadd.f32 %v1595, %v1596
        %v1598 = vrot.slane %v1597, 4
        %v1599 = vadd.f32 %v1597, %v1598
        %v1600 = vrot.slane %v1599, 2
        %v1601 = vadd.f32 %v1599, %v1600
        %v1602 = vrot.slane %v1601, 1
        %v1603 = vadd.f32 %v1601, %v1602
        %vm1612 = vcmask 1041409
        %v1613 = vsel %vm1612, %v1189, %v1120
        %vm1614 = vcmask 1042434
        %v1615 = vsel %vm1614, %v1258, %v1613
        %vm1616 = vcmask 1043459
        %v1617 = vsel %vm1616, %v1327, %v1615
        %vm1618 = vcmask 1044484
        %v1619 = vsel %vm1618, %v1396, %v1617
        %vm1620 = vcmask 1045509
        %v1621 = vsel %vm1620, %v1465, %v1619
        %vm1622 = vcmask 1046534
        %v1623 = vsel %vm1622, %v1534, %v1621
        %vm1624 = vcmask 1047559
        %v1625 = vsel %vm1624, %v1603, %v1623
        %v1627 = vadd.f32 %v1050, %v1625
        %1628 = vst.msk [vmem:[#allocation2] sm:$0xff] %vm1051, %v1627
        %p1629 = scmp.eq.s32.totalorder %s20, 3
        // Predicated region
        $region81: #{tpu_custom_call.1} parent=71 // pred_check
          %p1630 = pneg %p1629
        $region82: #{tpu_custom_call.1} parent=71 // pred_check_branch
          %1632 = sbr.rel (%p1630) target = $region84
        $region83: #{tpu_custom_call.1} parent=71 // pred_region
          %v1633 = vld [vmem:[#allocation2] sm:$0xff]
          %v1634 = vmul.f32 %v1633, 0.001
          %1635 = vst.msk [vmem:[%s393] sm:$0xff] %vm1051, %v1634
        $region84: #{tpu_custom_call.1} parent=71 // pred_fallthru
          _
        %s1636 = sand.u32 %s63, 1
        %s1637 = scalar_lea.sflag [#allocation5], %s1636
        %s1638 = sand.u32 %s63, 1
        %s1639 = smul.addr %s1638, 8
        %s1640 = scalar_lea.vmem [#allocation4], %s1639
        // Predicated region
        $region85: #{tpu_custom_call.1} parent=71 // pred_check
          %p1641 = pneg %p73
        $region86: #{tpu_custom_call.1} parent=71 // pred_check_branch
          %1643 = sbr.rel (%p1641) target = $region88
        $region87: #{tpu_custom_call.1} parent=71 // pred_region
          %1645 = vsyncadd %s1637, 0
          %s1646 = smul.addr %s19, 8
          %s1647 = scalar_lea.hbm %s1, %s1646
          %s1649 = sshll.u32 %s1640, 4
          %s1650 = int_to_ptr.vmem [resolvable:$true] %s1649
          %s1651 = sshll.u32 %s1647, 4
          %s1652 = int_to_ptr.hbm [resolvable:$true] %s1651
          %1654 = dma.vmem_to_hbm [thread:$0]  %s1650, 128, %s1652, %s1637
        $region88: #{tpu_custom_call.1} parent=71 // pred_fallthru
          _
      $region72: #{tpu_custom_call.1} parent=5 // pred_fallthru
        _
      %p1655 = scmp.le.s32.totalorder 2, %s10
      // Predicated region
      $region89: #{tpu_custom_call.1} parent=5 // pred_check
        %p1656 = pneg %p1655
      $region90: #{tpu_custom_call.1} parent=5 // pred_check_branch
        %1658 = sbr.rel (%p1656) target = $region92
      $region91: #{tpu_custom_call.1} parent=5 // pred_region
        %s1659 = ssub.s32 %s10, 2
        // Predicated region
        $region93: #{tpu_custom_call.1} parent=91 // pred_check
          %p1660 = pneg %p79
        $region94: #{tpu_custom_call.1} parent=91 // pred_check_branch
          %1662 = sbr.rel (%p1660) target = $region96
        $region95: #{tpu_custom_call.1} parent=91 // pred_region
          %s1663 = sand.u32 %s64, 1
          %s1664 = scalar_lea.sflag [#allocation5], %s1663
          %s1665 = sand.u32 %s64, 1
          %s1666 = smul.addr %s1665, 8
          %s1667 = scalar_lea.vmem [#allocation4], %s1666
          %1669 = dma.done %s1664, 128
        $region96: #{tpu_custom_call.1} parent=91 // pred_fallthru
          _
      $region92: #{tpu_custom_call.1} parent=5 // pred_fallthru
        _
    $region6: #{tpu_custom_call.1} parent=1 // loop_footer
      %s14 = sadd.s32 1, %s10
    $region7: #{tpu_custom_call.1} parent=1 // loop_footer_branch
      %9 = sbr.rel target = $region3
    $region8: #{tpu_custom_call.1} parent=1 // loop_exit
      _
    %1670 = vsyncpa [#allocation5], 1
    %s1671 = scalar_lea.sflag [#allocation5], 1
    %1672 = vsyncpa %s1671, 1

</llo_original>
